<compile_context>
chip_gen: v7x
topology: tpu7x:2x2x1
jax: 0.10.0
libtpu: 0.0.40
codegen_flags: <defaults>
</compile_context>

<pallas_src>
from functools import partial

import jax
import jax.numpy as jnp
import numpy as np
from jax import lax
from jax.experimental import pallas as pl
from jax.experimental.pallas import tpu as pltpu


def dark_residual_kernel(x_ref, xt_ref, xb_ref, w1_ref, s1_ref, b1_ref,
                         w2_ref, s2_ref, b2_ref, o_ref, col_ref,
                         *, TILE_H, W, Cp, Crp, d):
    """One (batch, H-tile) block per grid step.

    x_ref   : (1, TILE_H*W, Cp)        f32   main tile rows (also the residual)
    xt_ref  : (1, d*W, Cp)             f32   d rows just above the tile (clamped at i==0)
    xb_ref  : (1, d*W, Cp)             f32   d rows just below the tile (clamped at last tile)
    w1_ref  : (Cp, Crp)                bf16  1x1 conv weight
    s1/b1   : (1, Crp)                 f32   folded BN1 scale / bias
    w2_ref  : (3, 3*Crp, Cp)           bf16  3x3 conv weight, kw taps fused on K
    s2/b2   : (1, Cp)                  f32   folded BN2 scale / bias
    o_ref   : (1, TILE_H*W, Cp)        f32   output block
    col_ref : ((TILE_H+2d)*W, 3*Crp)   bf16  im2col scratch (kw taps on lanes, rows flattened)
    """
    f32 = jnp.float32
    bf16 = jnp.bfloat16
    HWt = TILE_H * W
    dW = d * W
    i = pl.program_id(1)

    def layer1(x2d):
        # 1x1 conv == channel matmul (bf16 MXU, f32 acc) + BN1 + LeakyReLU(0.01).
        h = jnp.dot(x2d.astype(bf16), w1_ref[...], preferred_element_type=f32)
        h = h * s1_ref[...] + b1_ref[...]
        return jnp.where(h > 0, h, 0.01 * h)

    def write_taps(row0, h1f):
        # h1f: (R*W, Crp) f32.  The kw taps (w-d, w, w+d) are built with XLU
        # rolls along the flattened row axis + a boundary zero mask, so all
        # three stores are aligned, unmasked, lane-dense bf16 vst.
        RW = h1f.shape[0]
        wcol = lax.broadcasted_iota(jnp.int32, (RW // W, W, Crp), 1).reshape(RW, Crp)
        zero = jnp.zeros_like(h1f)
        tap_m = jnp.where(wcol >= d, pltpu.roll(h1f, d, axis=0), zero)          # reads w-d
        tap_p = jnp.where(wcol < W - d, pltpu.roll(h1f, RW - d, axis=0), zero)  # reads w+d
        col_ref[row0:row0 + RW, 0:Crp] = tap_m.astype(bf16)
        col_ref[row0:row0 + RW, Crp:2 * Crp] = h1f.astype(bf16)
        col_ref[row0:row0 + RW, 2 * Crp:3 * Crp] = tap_p.astype(bf16)

    # ---- layer1 on the main tile + the two d-row halos ------------------------
    write_taps(dW, layer1(x_ref[0]))

    # Halo rows: real data for interior tiles, zeros at the image boundary.
    # The validity factor turns the boundary case into a multiply-by-zero, so
    # there is no conditional matmul and no separate strip zeroing.
    top_ok = (i > 0).astype(f32)
    bot_ok = (i < pl.num_programs(1) - 1).astype(f32)
    write_taps(0, layer1(xt_ref[0]) * top_ok)
    write_taps(dW + HWt, layer1(xb_ref[0]) * bot_ok)

    # ---- layer2: 3x3 dilated conv == 3 MXU matmuls with K = 3*Crp (bf16) -----
    # kh shifts are aligned row slices of the flattened bf16 scratch.
    acc = jnp.dot(col_ref[0:HWt, :], w2_ref[0], preferred_element_type=f32)
    acc = acc + jnp.dot(col_ref[dW:dW + HWt, :], w2_ref[1], preferred_element_type=f32)
    acc = acc + jnp.dot(col_ref[2 * dW:2 * dW + HWt, :], w2_ref[2], preferred_element_type=f32)

    # ---- BN2 + LeakyReLU + residual, fused with the last accumulation --------
    y = acc * s2_ref[...] + b2_ref[...]
    y = jnp.where(y > 0, y, 0.01 * y)
    o_ref[0] = y + x_ref[0]


def _round_up(n, m):
    return (n + m - 1) // m * m


def _vmem_limit_bytes():
    """Scoped-VMEM limit derived from the actual chip (v7x-safe fallback)."""
    cap = 64 * 1024 * 1024
    try:
        cap = int(pltpu.get_tpu_info().vmem_capacity_bytes)
    except Exception:
        pass
    return max(32 * 1024 * 1024, min(cap * 3 // 4, 100 * 1024 * 1024))


def _estimate_vmem_bytes(tile_h, W, Cp, Crp, d):
    hwt, dw = tile_h * W, d * W
    io = 2 * 2 * hwt * Cp * 4                      # x tile + o tile, double-buffered f32
    halo = 2 * 2 * 2 * dw * Cp * 4                 # two halo strips, double-buffered f32
    col = (hwt + 2 * dw) * 3 * Crp * 2             # bf16 im2col scratch
    wts = 2 * (Cp * Crp + 3 * 3 * Crp * Cp) * 2    # w1 + w2, double-buffered bf16
    tmp = 4 * hwt * max(Cp, 3 * Crp) * 4           # h1 / rolled taps / f32 accumulator
    return io + halo + col + wts + tmp


def _pick_tile_h(H, W, Cp, Crp, d, budget):
    cands = [t for t in range(H, 0, -1) if H % t == 0 and t % d == 0]
    for t in cands:
        if _estimate_vmem_bytes(t, W, Cp, Crp, d) <= budget:
            return t
    return cands[-1]


def dark_residual_block(x_nchw, params, d=1, tile_h=None):
    """NCHW in / NCHW out wrapper around the lane-dense, H-tiled Pallas kernel."""
    N, C, H, W = x_nchw.shape
    Cr = C // 2
    Cp = _round_up(C, 128)
    Crp = _round_up(Cr, 128)
    HW = H * W

    # TODO(synk): support W % 8 != 0 by padding W and zeroing the padded h1
    #             columns in-kernel; typical Darknet widths already satisfy this.
    assert W % 8 == 0, "W must be a multiple of 8"
    assert d >= 1 and W > d and H > d

    vmem_limit = _vmem_limit_bytes()
    if tile_h is None:
        tile_h = _pick_tile_h(H, W, Cp, Crp, d, budget=vmem_limit // 2)
    assert H % tile_h == 0 and tile_h % d == 0, (H, tile_h, d)
    n_tiles = H // tile_h
    HWt = tile_h * W
    dW = d * W
    r = tile_h // d              # halo stride, in dW-row blocks, per H tile
    n_dw_blocks = H // d         # number of dW-row blocks covering the image

    # NCHW -> NHWC -> (N, H*W, C), lane-pad channels to a multiple of 128.
    x = jnp.transpose(x_nchw, (0, 2, 3, 1)).astype(jnp.float32).reshape(N, HW, C)
    x = jnp.pad(x, ((0, 0), (0, 0), (0, Cp - C)))

    # Zero-padded lanes keep the padded channels exactly zero through both
    # layers and the residual add.
    w1 = jnp.pad(params["w1"], ((0, Cp - C), (0, Crp - Cr))).astype(jnp.bfloat16)   # (Cp, Crp)
    s1 = jnp.pad(params["s1"], ((0, 0), (0, Crp - Cr))).astype(jnp.float32)         # (1, Crp)
    b1 = jnp.pad(params["b1"], ((0, 0), (0, Crp - Cr))).astype(jnp.float32)
    w2 = jnp.pad(params["w2"], ((0, 0), (0, 0), (0, Crp - Cr), (0, Cp - C)))        # (3,3,Crp,Cp)
    w2 = w2.reshape(3, 3 * Crp, Cp).astype(jnp.bfloat16)                            # kw fused on K
    s2 = jnp.pad(params["s2"], ((0, 0), (0, Cp - C))).astype(jnp.float32)           # (1, Cp)
    b2 = jnp.pad(params["b2"], ((0, 0), (0, Cp - C))).astype(jnp.float32)

    kernel = partial(dark_residual_kernel, TILE_H=tile_h, W=W, Cp=Cp, Crp=Crp, d=d)

    out = pl.pallas_call(
        kernel,
        out_shape=jax.ShapeDtypeStruct((N, HW, Cp), jnp.float32),
        grid_spec=pltpu.PrefetchScalarGridSpec(
            num_scalar_prefetch=0,
            grid=(N, n_tiles),
            in_specs=[
                pl.BlockSpec((1, HWt, Cp), lambda n, i: (n, i, 0)),                     # x tile
                pl.BlockSpec((1, dW, Cp),
                             lambda n, i: (n, jnp.maximum(i * r - 1, 0), 0)),           # top halo
                pl.BlockSpec((1, dW, Cp),
                             lambda n, i: (n, jnp.minimum((i + 1) * r,
                                                          n_dw_blocks - 1), 0)),        # bottom halo
                pl.BlockSpec((Cp, Crp), lambda n, i: (0, 0)),                           # w1
                pl.BlockSpec((1, Crp), lambda n, i: (0, 0)),                            # bn1 scale
                pl.BlockSpec((1, Crp), lambda n, i: (0, 0)),                            # bn1 bias
                pl.BlockSpec((3, 3 * Crp, Cp), lambda n, i: (0, 0, 0)),                 # w2 (fused K)
                pl.BlockSpec((1, Cp), lambda n, i: (0, 0)),                             # bn2 scale
                pl.BlockSpec((1, Cp), lambda n, i: (0, 0)),                             # bn2 bias
            ],
            out_specs=pl.BlockSpec((1, HWt, Cp), lambda n, i: (n, i, 0)),
            scratch_shapes=[pltpu.VMEM((HWt + 2 * dW, 3 * Crp), jnp.bfloat16)],
        ),
        compiler_params=pltpu.CompilerParams(
            dimension_semantics=("parallel", "parallel"),   # batch x H-tiles independent
            vmem_limit_bytes=vmem_limit,
        ),
    )(x, x, x, w1, s1, b1, w2, s2, b2)

    out = out[:, :, :C].reshape(N, H, W, C)
    return jnp.transpose(out, (0, 3, 1, 2))                   # back to NCHW


def make_params(key, C, d=1, eps=1e-5):
    """Deterministic synthetic parameters (shapes implied by the module __init__)."""
    Cr = C // 2
    ks = jax.random.split(key, 10)
    # PyTorch conv weights: w1_t (Cr, C, 1, 1), w2_t (C, Cr, 3, 3)
    w1_t = jax.random.normal(ks[0], (Cr, C, 1, 1), jnp.float32) * 0.3
    w2_t = jax.random.normal(ks[1], (C, Cr, 3, 3), jnp.float32) * 0.3
    g1 = 0.5 + jax.random.uniform(ks[2], (Cr,), jnp.float32)
    be1 = 0.1 * jax.random.normal(ks[3], (Cr,), jnp.float32)
    m1 = 0.1 * jax.random.normal(ks[4], (Cr,), jnp.float32)
    v1 = 0.5 + jax.random.uniform(ks[5], (Cr,), jnp.float32)
    g2 = 0.5 + jax.random.uniform(ks[6], (C,), jnp.float32)
    be2 = 0.1 * jax.random.normal(ks[7], (C,), jnp.float32)
    m2 = 0.1 * jax.random.normal(ks[8], (C,), jnp.float32)
    v2 = 0.5 + jax.random.uniform(ks[9], (C,), jnp.float32)

    s1 = g1 / jnp.sqrt(v1 + eps)
    b1 = be1 - m1 * s1
    s2 = g2 / jnp.sqrt(v2 + eps)
    b2 = be2 - m2 * s2

    return {
        # kernel-layout weights: w1[i, o] = w1_t[o, i]; w2[kh, kw, i, o] = w2_t[o, i, kh, kw]
        "w1": jnp.transpose(w1_t[:, :, 0, 0], (1, 0)),          # (C, Cr)
        "w2": jnp.transpose(w2_t, (2, 3, 1, 0)),                # (3, 3, Cr, C) == HWIO
        "s1": s1[None, :], "b1": b1[None, :],                   # (1, Cr)
        "s2": s2[None, :], "b2": b2[None, :],                   # (1, C)
    }


def reference_forward(x_nchw, params, d=1):
    """Pure-JAX (XLA conv) reference.  Conv operands are cast to bf16 with f32
    accumulation to mirror the kernel's MXU numerics; BN / LeakyReLU / residual
    are in f32, as in the kernel."""
    x = jnp.transpose(x_nchw, (0, 2, 3, 1)).astype(jnp.float32)   # NHWC
    w1 = params["w1"][None, None]                                 # (1,1,C,Cr) HWIO
    dn1 = lax.conv_dimension_numbers(x.shape, w1.shape, ("NHWC", "HWIO", "NHWC"))
    h = lax.conv_general_dilated(
        x.astype(jnp.bfloat16), w1.astype(jnp.bfloat16), (1, 1), [(0, 0), (0, 0)],
        dimension_numbers=dn1, preferred_element_type=jnp.float32)
    h = h * params["s1"] + params["b1"]
    h = jnp.where(h > 0, h, 0.01 * h)
    w2 = params["w2"]                                             # (3,3,Cr,C) HWIO
    dn2 = lax.conv_dimension_numbers(h.shape, w2.shape, ("NHWC", "HWIO", "NHWC"))
    o = lax.conv_general_dilated(
        h.astype(jnp.bfloat16), w2.astype(jnp.bfloat16), (1, 1), [(d, d), (d, d)],
        rhs_dilation=(d, d), dimension_numbers=dn2, preferred_element_type=jnp.float32)
    o = o * params["s2"] + params["b2"]
    o = jnp.where(o > 0, o, 0.01 * o)
    o = o + x
    return jnp.transpose(o, (0, 3, 1, 2))


if __name__ == "__main__":
    key = jax.random.PRNGKey(0)
    # (N, C, H, W, d, tile_h) -- tile_h chosen so the H-tiling / halo path is exercised.
    configs = [
        (2, 4, 16, 16, 1, 8),
        (1, 8, 24, 16, 2, 8),
    ]
    for idx, (N, C, H, W, d, tile_h) in enumerate(configs):
        k_x, k_p = jax.random.split(jax.random.fold_in(key, idx))
        x = jax.random.normal(k_x, (N, C, H, W), jnp.float32)
        params = make_params(k_p, C, d=d)

        out = jax.block_until_ready(dark_residual_block(x, params, d=d, tile_h=tile_h))
        ref = jax.block_until_ready(reference_forward(x, params, d=d))

        np.testing.assert_allclose(np.asarray(out), np.asarray(ref), rtol=1e-2, atol=1e-2)
        assert out.shape == (N, C, H, W)

    print("KERNEL_OK")
</pallas_src>

<mosaic_0001>
module attributes {stable_mosaic.version = 11 : i64} {
  func.func @dark_residual_kernel(%arg0: i32, %arg1: i32, %arg2: memref<1x128x128xf32, #tpu.memory_space<vmem>>, %arg3: memref<1x16x128xf32, #tpu.memory_space<vmem>>, %arg4: memref<1x16x128xf32, #tpu.memory_space<vmem>>, %arg5: memref<128x128xbf16, #tpu.memory_space<vmem>>, %arg6: memref<1x128xf32, #tpu.memory_space<vmem>>, %arg7: memref<1x128xf32, #tpu.memory_space<vmem>>, %arg8: memref<3x384x128xbf16, #tpu.memory_space<vmem>>, %arg9: memref<1x128xf32, #tpu.memory_space<vmem>>, %arg10: memref<1x128xf32, #tpu.memory_space<vmem>>, %arg11: memref<1x128x128xf32, #tpu.memory_space<vmem>>, %arg12: memref<160x384xbf16, #tpu.memory_space<vmem>>) attributes {dimension_semantics = [#tpu.dimension_semantics<parallel>, #tpu.dimension_semantics<parallel>], iteration_bounds = array<i64: 2, 2>, scalar_prefetch = 0 : i64, scratch_operands = 1 : i64, tpu.core_type = #tpu.core_type<tc>, window_params = [{transform_indices = @transform_0, window_bounds = array<i64: 1, 128, 128>}, {transform_indices = @transform_1, window_bounds = array<i64: 1, 16, 128>}, {transform_indices = @transform_2, window_bounds = array<i64: 1, 16, 128>}, {pipeline_mode = #tpu.pipeline_mode<synchronous>, transform_indices = @transform_3, window_bounds = array<i64: 128, 128>}, {pipeline_mode = #tpu.pipeline_mode<synchronous>, transform_indices = @transform_4, window_bounds = array<i64: 1, 128>}, {pipeline_mode = #tpu.pipeline_mode<synchronous>, transform_indices = @transform_5, window_bounds = array<i64: 1, 128>}, {pipeline_mode = #tpu.pipeline_mode<synchronous>, transform_indices = @transform_6, window_bounds = array<i64: 3, 384, 128>}, {pipeline_mode = #tpu.pipeline_mode<synchronous>, transform_indices = @transform_7, window_bounds = array<i64: 1, 128>}, {pipeline_mode = #tpu.pipeline_mode<synchronous>, transform_indices = @transform_8, window_bounds = array<i64: 1, 128>}, {transform_indices = @transform_9, window_bounds = array<i64: 1, 128, 128>}]} {
    %c0 = arith.constant 0 : index
    %c0_0 = arith.constant 0 : index
    %c0_1 = arith.constant 0 : index
    %0 = vector.load %arg2[%c0, %c0_0, %c0_1] : memref<1x128x128xf32, #tpu.memory_space<vmem>>, vector<1x128x128xf32>
    %1 = vector.shape_cast %0 : vector<1x128x128xf32> to vector<128x128xf32>
    %2 = arith.truncf %1 : vector<128x128xf32> to vector<128x128xbf16>
    %c0_2 = arith.constant 0 : index
    %c0_3 = arith.constant 0 : index
    %3 = vector.load %arg5[%c0_2, %c0_3] : memref<128x128xbf16, #tpu.memory_space<vmem>>, vector<128x128xbf16>
    %cst = arith.constant dense<0.000000e+00> : vector<128x128xf32>
    %4 = tpu.matmul %2, %3, %cst {dimension_numbers = #tpu.dot_dimension_numbers<[1], [0], [0], [1], [0, 0, 1, 1], [], []>} : vector<128x128xbf16>, vector<128x128xbf16>, vector<128x128xf32> -> vector<128x128xf32>
    %c0_4 = arith.constant 0 : index
    %c0_5 = arith.constant 0 : index
    %5 = vector.load %arg6[%c0_4, %c0_5] : memref<1x128xf32, #tpu.memory_space<vmem>>, vector<1x128xf32>
    %6 = vector.broadcast %5 : vector<1x128xf32> to vector<128x128xf32>
    %7 = arith.mulf %4, %6 : vector<128x128xf32>
    %c0_6 = arith.constant 0 : index
    %c0_7 = arith.constant 0 : index
    %8 = vector.load %arg7[%c0_6, %c0_7] : memref<1x128xf32, #tpu.memory_space<vmem>>, vector<1x128xf32>
    %9 = vector.broadcast %8 : vector<1x128xf32> to vector<128x128xf32>
    %10 = arith.addf %7, %9 : vector<128x128xf32>
    %cst_8 = arith.constant 0.000000e+00 : f32
    %11 = vector.broadcast %cst_8 : f32 to vector<128x128xf32>
    %12 = arith.cmpf ogt, %10, %11 : vector<128x128xf32>
    %cst_9 = arith.constant 0.00999999977 : f32
    %13 = vector.broadcast %cst_9 : f32 to vector<128x128xf32>
    %14 = arith.mulf %13, %10 : vector<128x128xf32>
    %15 = arith.select %12, %10, %14 : vector<128x128xi1>, vector<128x128xf32>
    %16 = tpu.iota {dimensions = array<i32: 1>} : vector<8x16x128xi32>
    %17 = vector.shape_cast %16 : vector<8x16x128xi32> to vector<128x128xi32>
    %cst_10 = arith.constant 0.000000e+00 : f32
    %18 = vector.broadcast %cst_10 : f32 to vector<128x128xf32>
    %c1_i32 = arith.constant 1 : i32
    %19 = vector.broadcast %c1_i32 : i32 to vector<128x128xi32>
    %20 = arith.cmpi sge, %17, %19 : vector<128x128xi32>
    %c1_i32_11 = arith.constant 1 : i32
    %21 = tpu.dynamic_rotate %15 by %c1_i32_11 dim 0 : vector<128x128xf32>, i32 -> vector<128x128xf32>
    %22 = arith.select %20, %21, %18 : vector<128x128xi1>, vector<128x128xf32>
    %c15_i32 = arith.constant 15 : i32
    %23 = vector.broadcast %c15_i32 : i32 to vector<128x128xi32>
    %24 = arith.cmpi slt, %17, %23 : vector<128x128xi32>
    %c127_i32 = arith.constant 127 : i32
    %25 = tpu.dynamic_rotate %15 by %c127_i32 dim 0 : vector<128x128xf32>, i32 -> vector<128x128xf32>
    %26 = arith.select %24, %25, %18 : vector<128x128xi1>, vector<128x128xf32>
    %27 = arith.truncf %22 : vector<128x128xf32> to vector<128x128xbf16>
    %c16 = arith.constant 16 : index
    %c0_12 = arith.constant 0 : index
    %28 = vector.load %arg12[%c16, %c0_12] : memref<160x384xbf16, #tpu.memory_space<vmem>>, vector<128x128xbf16>
    tpu.vector_store %arg12[%c16, %c0_12], %27 {strides = array<i32>} : memref<160x384xbf16, #tpu.memory_space<vmem>>, vector<128x128xbf16>,
    %29 = arith.truncf %15 : vector<128x128xf32> to vector<128x128xbf16>
    %c16_13 = arith.constant 16 : index
    %c128 = arith.constant 128 : index
    %30 = vector.load %arg12[%c16_13, %c128] : memref<160x384xbf16, #tpu.memory_space<vmem>>, vector<128x128xbf16>
    tpu.vector_store %arg12[%c16_13, %c128], %29 {strides = array<i32>} : memref<160x384xbf16, #tpu.memory_space<vmem>>, vector<128x128xbf16>,
    %31 = arith.truncf %26 : vector<128x128xf32> to vector<128x128xbf16>
    %c16_14 = arith.constant 16 : index
    %c256 = arith.constant 256 : index
    %32 = vector.load %arg12[%c16_14, %c256] : memref<160x384xbf16, #tpu.memory_space<vmem>>, vector<128x128xbf16>
    tpu.vector_store %arg12[%c16_14, %c256], %31 {strides = array<i32>} : memref<160x384xbf16, #tpu.memory_space<vmem>>, vector<128x128xbf16>,
    %c0_i32 = arith.constant 0 : i32
    %33 = arith.cmpi sgt, %arg1, %c0_i32 : i32
    %34 = arith.extui %33 : i1 to i32
    %35 = arith.sitofp %34 : i32 to f32
    %c1_i32_15 = arith.constant 1 : i32
    %36 = arith.cmpi slt, %arg1, %c1_i32_15 : i32
    %37 = arith.extui %36 : i1 to i32
    %38 = arith.sitofp %37 : i32 to f32
    %c0_16 = arith.constant 0 : index
    %c0_17 = arith.constant 0 : index
    %c0_18 = arith.constant 0 : index
    %39 = vector.load %arg3[%c0_16, %c0_17, %c0_18] : memref<1x16x128xf32, #tpu.memory_space<vmem>>, vector<1x16x128xf32>
    %40 = vector.shape_cast %39 : vector<1x16x128xf32> to vector<16x128xf32>
    %41 = arith.truncf %40 : vector<16x128xf32> to vector<16x128xbf16>
    %c0_19 = arith.constant 0 : index
    %c0_20 = arith.constant 0 : index
    %42 = vector.load %arg5[%c0_19, %c0_20] : memref<128x128xbf16, #tpu.memory_space<vmem>>, vector<128x128xbf16>
    %cst_21 = arith.constant dense<0.000000e+00> : vector<16x128xf32>
    %43 = tpu.matmul %41, %42, %cst_21 {dimension_numbers = #tpu.dot_dimension_numbers<[1], [0], [0], [1], [0, 0, 1, 1], [], []>} : vector<16x128xbf16>, vector<128x128xbf16>, vector<16x128xf32> -> vector<16x128xf32>
    %c0_22 = arith.constant 0 : index
    %c0_23 = arith.constant 0 : index
    %44 = vector.load %arg6[%c0_22, %c0_23] : memref<1x128xf32, #tpu.memory_space<vmem>>, vector<1x128xf32>
    %45 = vector.broadcast %44 : vector<1x128xf32> to vector<16x128xf32>
    %46 = arith.mulf %43, %45 : vector<16x128xf32>
    %c0_24 = arith.constant 0 : index
    %c0_25 = arith.constant 0 : index
    %47 = vector.load %arg7[%c0_24, %c0_25] : memref<1x128xf32, #tpu.memory_space<vmem>>, vector<1x128xf32>
    %48 = vector.broadcast %47 : vector<1x128xf32> to vector<16x128xf32>
    %49 = arith.addf %46, %48 : vector<16x128xf32>
    %cst_26 = arith.constant 0.000000e+00 : f32
    %50 = vector.broadcast %cst_26 : f32 to vector<16x128xf32>
    %51 = arith.cmpf ogt, %49, %50 : vector<16x128xf32>
    %cst_27 = arith.constant 0.00999999977 : f32
    %52 = vector.broadcast %cst_27 : f32 to vector<16x128xf32>
    %53 = arith.mulf %52, %49 : vector<16x128xf32>
    %54 = arith.select %51, %49, %53 : vector<16x128xi1>, vector<16x128xf32>
    %55 = vector.broadcast %35 : f32 to vector<16x128xf32>
    %56 = arith.mulf %54, %55 : vector<16x128xf32>
    %57 = tpu.iota {dimensions = array<i32: 1>} : vector<1x16x128xi32>
    %58 = vector.shape_cast %57 : vector<1x16x128xi32> to vector<16x128xi32>
    %cst_28 = arith.constant 0.000000e+00 : f32
    %59 = vector.broadcast %cst_28 : f32 to vector<16x128xf32>
    %c1_i32_29 = arith.constant 1 : i32
    %60 = vector.broadcast %c1_i32_29 : i32 to vector<16x128xi32>
    %61 = arith.cmpi sge, %58, %60 : vector<16x128xi32>
    %c1_i32_30 = arith.constant 1 : i32
    %62 = tpu.dynamic_rotate %56 by %c1_i32_30 dim 0 : vector<16x128xf32>, i32 -> vector<16x128xf32>
    %63 = arith.select %61, %62, %59 : vector<16x128xi1>, vector<16x128xf32>
    %c15_i32_31 = arith.constant 15 : i32
    %64 = vector.broadcast %c15_i32_31 : i32 to vector<16x128xi32>
    %65 = arith.cmpi slt, %58, %64 : vector<16x128xi32>
    %c15_i32_32 = arith.constant 15 : i32
    %66 = tpu.dynamic_rotate %56 by %c15_i32_32 dim 0 : vector<16x128xf32>, i32 -> vector<16x128xf32>
    %67 = arith.select %65, %66, %59 : vector<16x128xi1>, vector<16x128xf32>
    %68 = arith.truncf %63 : vector<16x128xf32> to vector<16x128xbf16>
    %c0_33 = arith.constant 0 : index
    %c0_34 = arith.constant 0 : index
    %69 = vector.load %arg12[%c0_33, %c0_34] : memref<160x384xbf16, #tpu.memory_space<vmem>>, vector<16x128xbf16>
    tpu.vector_store %arg12[%c0_33, %c0_34], %68 {strides = array<i32>} : memref<160x384xbf16, #tpu.memory_space<vmem>>, vector<16x128xbf16>,
    %70 = arith.truncf %56 : vector<16x128xf32> to vector<16x128xbf16>
    %c0_35 = arith.constant 0 : index
    %c128_36 = arith.constant 128 : index
    %71 = vector.load %arg12[%c0_35, %c128_36] : memref<160x384xbf16, #tpu.memory_space<vmem>>, vector<16x128xbf16>
    tpu.vector_store %arg12[%c0_35, %c128_36], %70 {strides = array<i32>} : memref<160x384xbf16, #tpu.memory_space<vmem>>, vector<16x128xbf16>,
    %72 = arith.truncf %67 : vector<16x128xf32> to vector<16x128xbf16>
    %c0_37 = arith.constant 0 : index
    %c256_38 = arith.constant 256 : index
    %73 = vector.load %arg12[%c0_37, %c256_38] : memref<160x384xbf16, #tpu.memory_space<vmem>>, vector<16x128xbf16>
    tpu.vector_store %arg12[%c0_37, %c256_38], %72 {strides = array<i32>} : memref<160x384xbf16, #tpu.memory_space<vmem>>, vector<16x128xbf16>,
    %c0_39 = arith.constant 0 : index
    %c0_40 = arith.constant 0 : index
    %c0_41 = arith.constant 0 : index
    %74 = vector.load %arg4[%c0_39, %c0_40, %c0_41] : memref<1x16x128xf32, #tpu.memory_space<vmem>>, vector<1x16x128xf32>
    %75 = vector.shape_cast %74 : vector<1x16x128xf32> to vector<16x128xf32>
    %76 = arith.truncf %75 : vector<16x128xf32> to vector<16x128xbf16>
    %c0_42 = arith.constant 0 : index
    %c0_43 = arith.constant 0 : index
    %77 = vector.load %arg5[%c0_42, %c0_43] : memref<128x128xbf16, #tpu.memory_space<vmem>>, vector<128x128xbf16>
    %cst_44 = arith.constant dense<0.000000e+00> : vector<16x128xf32>
    %78 = tpu.matmul %76, %77, %cst_44 {dimension_numbers = #tpu.dot_dimension_numbers<[1], [0], [0], [1], [0, 0, 1, 1], [], []>} : vector<16x128xbf16>, vector<128x128xbf16>, vector<16x128xf32> -> vector<16x128xf32>
    %c0_45 = arith.constant 0 : index
    %c0_46 = arith.constant 0 : index
    %79 = vector.load %arg6[%c0_45, %c0_46] : memref<1x128xf32, #tpu.memory_space<vmem>>, vector<1x128xf32>
    %80 = vector.broadcast %79 : vector<1x128xf32> to vector<16x128xf32>
    %81 = arith.mulf %78, %80 : vector<16x128xf32>
    %c0_47 = arith.constant 0 : index
    %c0_48 = arith.constant 0 : index
    %82 = vector.load %arg7[%c0_47, %c0_48] : memref<1x128xf32, #tpu.memory_space<vmem>>, vector<1x128xf32>
    %83 = vector.broadcast %82 : vector<1x128xf32> to vector<16x128xf32>
    %84 = arith.addf %81, %83 : vector<16x128xf32>
    %cst_49 = arith.constant 0.000000e+00 : f32
    %85 = vector.broadcast %cst_49 : f32 to vector<16x128xf32>
    %86 = arith.cmpf ogt, %84, %85 : vector<16x128xf32>
    %cst_50 = arith.constant 0.00999999977 : f32
    %87 = vector.broadcast %cst_50 : f32 to vector<16x128xf32>
    %88 = arith.mulf %87, %84 : vector<16x128xf32>
    %89 = arith.select %86, %84, %88 : vector<16x128xi1>, vector<16x128xf32>
    %90 = vector.broadcast %38 : f32 to vector<16x128xf32>
    %91 = arith.mulf %89, %90 : vector<16x128xf32>
    %92 = tpu.iota {dimensions = array<i32: 1>} : vector<1x16x128xi32>
    %93 = vector.shape_cast %92 : vector<1x16x128xi32> to vector<16x128xi32>
    %cst_51 = arith.constant 0.000000e+00 : f32
    %94 = vector.broadcast %cst_51 : f32 to vector<16x128xf32>
    %c1_i32_52 = arith.constant 1 : i32
    %95 = vector.broadcast %c1_i32_52 : i32 to vector<16x128xi32>
    %96 = arith.cmpi sge, %93, %95 : vector<16x128xi32>
    %c1_i32_53 = arith.constant 1 : i32
    %97 = tpu.dynamic_rotate %91 by %c1_i32_53 dim 0 : vector<16x128xf32>, i32 -> vector<16x128xf32>
    %98 = arith.select %96, %97, %94 : vector<16x128xi1>, vector<16x128xf32>
    %c15_i32_54 = arith.constant 15 : i32
    %99 = vector.broadcast %c15_i32_54 : i32 to vector<16x128xi32>
    %100 = arith.cmpi slt, %93, %99 : vector<16x128xi32>
    %c15_i32_55 = arith.constant 15 : i32
    %101 = tpu.dynamic_rotate %91 by %c15_i32_55 dim 0 : vector<16x128xf32>, i32 -> vector<16x128xf32>
    %102 = arith.select %100, %101, %94 : vector<16x128xi1>, vector<16x128xf32>
    %103 = arith.truncf %98 : vector<16x128xf32> to vector<16x128xbf16>
    %c144 = arith.constant 144 : index
    %c0_56 = arith.constant 0 : index
    %104 = vector.load %arg12[%c144, %c0_56] : memref<160x384xbf16, #tpu.memory_space<vmem>>, vector<16x128xbf16>
    tpu.vector_store %arg12[%c144, %c0_56], %103 {strides = array<i32>} : memref<160x384xbf16, #tpu.memory_space<vmem>>, vector<16x128xbf16>,
    %105 = arith.truncf %91 : vector<16x128xf32> to vector<16x128xbf16>
    %c144_57 = arith.constant 144 : index
    %c128_58 = arith.constant 128 : index
    %106 = vector.load %arg12[%c144_57, %c128_58] : memref<160x384xbf16, #tpu.memory_space<vmem>>, vector<16x128xbf16>
    tpu.vector_store %arg12[%c144_57, %c128_58], %105 {strides = array<i32>} : memref<160x384xbf16, #tpu.memory_space<vmem>>, vector<16x128xbf16>,
    %107 = arith.truncf %102 : vector<16x128xf32> to vector<16x128xbf16>
    %c144_59 = arith.constant 144 : index
    %c256_60 = arith.constant 256 : index
    %108 = vector.load %arg12[%c144_59, %c256_60] : memref<160x384xbf16, #tpu.memory_space<vmem>>, vector<16x128xbf16>
    tpu.vector_store %arg12[%c144_59, %c256_60], %107 {strides = array<i32>} : memref<160x384xbf16, #tpu.memory_space<vmem>>, vector<16x128xbf16>,
    %c0_61 = arith.constant 0 : index
    %c0_62 = arith.constant 0 : index
    %109 = vector.load %arg12[%c0_61, %c0_62] : memref<160x384xbf16, #tpu.memory_space<vmem>>, vector<128x384xbf16>
    %c0_63 = arith.constant 0 : index
    %c0_64 = arith.constant 0 : index
    %c0_65 = arith.constant 0 : index
    %110 = vector.load %arg8[%c0_63, %c0_64, %c0_65] : memref<3x384x128xbf16, #tpu.memory_space<vmem>>, vector<1x384x128xbf16>
    %111 = vector.shape_cast %110 : vector<1x384x128xbf16> to vector<384x128xbf16>
    %cst_66 = arith.constant dense<0.000000e+00> : vector<128x128xf32>
    %112 = tpu.matmul %109, %111, %cst_66 {dimension_numbers = #tpu.dot_dimension_numbers<[1], [0], [0], [1], [0, 0, 1, 1], [], []>} : vector<128x384xbf16>, vector<384x128xbf16>, vector<128x128xf32> -> vector<128x128xf32>
    %c16_67 = arith.constant 16 : index
    %c0_68 = arith.constant 0 : index
    %113 = vector.load %arg12[%c16_67, %c0_68] : memref<160x384xbf16, #tpu.memory_space<vmem>>, vector<128x384xbf16>
    %c1 = arith.constant 1 : index
    %c0_69 = arith.constant 0 : index
    %c0_70 = arith.constant 0 : index
    %114 = vector.load %arg8[%c1, %c0_69, %c0_70] : memref<3x384x128xbf16, #tpu.memory_space<vmem>>, vector<1x384x128xbf16>
    %115 = vector.shape_cast %114 : vector<1x384x128xbf16> to vector<384x128xbf16>
    %cst_71 = arith.constant dense<0.000000e+00> : vector<128x128xf32>
    %116 = tpu.matmul %113, %115, %cst_71 {dimension_numbers = #tpu.dot_dimension_numbers<[1], [0], [0], [1], [0, 0, 1, 1], [], []>} : vector<128x384xbf16>, vector<384x128xbf16>, vector<128x128xf32> -> vector<128x128xf32>
    %117 = arith.addf %112, %116 : vector<128x128xf32>
    %c32 = arith.constant 32 : index
    %c0_72 = arith.constant 0 : index
    %118 = vector.load %arg12[%c32, %c0_72] : memref<160x384xbf16, #tpu.memory_space<vmem>>, vector<128x384xbf16>
    %c2 = arith.constant 2 : index
    %c0_73 = arith.constant 0 : index
    %c0_74 = arith.constant 0 : index
    %119 = vector.load %arg8[%c2, %c0_73, %c0_74] : memref<3x384x128xbf16, #tpu.memory_space<vmem>>, vector<1x384x128xbf16>
    %120 = vector.shape_cast %119 : vector<1x384x128xbf16> to vector<384x128xbf16>
    %cst_75 = arith.constant dense<0.000000e+00> : vector<128x128xf32>
    %121 = tpu.matmul %118, %120, %cst_75 {dimension_numbers = #tpu.dot_dimension_numbers<[1], [0], [0], [1], [0, 0, 1, 1], [], []>} : vector<128x384xbf16>, vector<384x128xbf16>, vector<128x128xf32> -> vector<128x128xf32>
    %122 = arith.addf %117, %121 : vector<128x128xf32>
    %c0_76 = arith.constant 0 : index
    %c0_77 = arith.constant 0 : index
    %123 = vector.load %arg9[%c0_76, %c0_77] : memref<1x128xf32, #tpu.memory_space<vmem>>, vector<1x128xf32>
    %124 = vector.broadcast %123 : vector<1x128xf32> to vector<128x128xf32>
    %125 = arith.mulf %122, %124 : vector<128x128xf32>
    %c0_78 = arith.constant 0 : index
    %c0_79 = arith.constant 0 : index
    %126 = vector.load %arg10[%c0_78, %c0_79] : memref<1x128xf32, #tpu.memory_space<vmem>>, vector<1x128xf32>
    %127 = vector.broadcast %126 : vector<1x128xf32> to vector<128x128xf32>
    %128 = arith.addf %125, %127 : vector<128x128xf32>
    %cst_80 = arith.constant 0.000000e+00 : f32
    %129 = vector.broadcast %cst_80 : f32 to vector<128x128xf32>
    %130 = arith.cmpf ogt, %128, %129 : vector<128x128xf32>
    %cst_81 = arith.constant 0.00999999977 : f32
    %131 = vector.broadcast %cst_81 : f32 to vector<128x128xf32>
    %132 = arith.mulf %131, %128 : vector<128x128xf32>
    %133 = arith.select %130, %128, %132 : vector<128x128xi1>, vector<128x128xf32>
    %c0_82 = arith.constant 0 : index
    %c0_83 = arith.constant 0 : index
    %c0_84 = arith.constant 0 : index
    %134 = vector.load %arg2[%c0_82, %c0_83, %c0_84] : memref<1x128x128xf32, #tpu.memory_space<vmem>>, vector<1x128x128xf32>
    %135 = vector.shape_cast %134 : vector<1x128x128xf32> to vector<128x128xf32>
    %136 = arith.addf %133, %135 : vector<128x128xf32>
    %c0_85 = arith.constant 0 : index
    %c0_86 = arith.constant 0 : index
    %c0_87 = arith.constant 0 : index
    %137 = vector.load %arg11[%c0_85, %c0_86, %c0_87] : memref<1x128x128xf32, #tpu.memory_space<vmem>>, vector<1x128x128xf32>
    %138 = vector.shape_cast %137 : vector<1x128x128xf32> to vector<128x128xf32>
    %139 = vector.shape_cast %136 : vector<128x128xf32> to vector<1x128x128xf32>
    tpu.vector_store %arg11[%c0_85, %c0_86, %c0_87], %139 {strides = array<i32>} : memref<1x128x128xf32, #tpu.memory_space<vmem>>, vector<1x128x128xf32>,
    return
  }
  func.func @transform_0(%arg0: i32, %arg1: i32) -> (i32, i32, i32) {
    %c0_i32 = arith.constant 0 : i32
    %c0_i32_0 = arith.constant 0 : i32
    return %arg0, %arg1, %c0_i32 : i32, i32, i32
  }
  func.func @transform_1(%arg0: i32, %arg1: i32) -> (i32, i32, i32) {
    %c8_i32 = arith.constant 8 : i32
    %0 = arith.muli %arg1, %c8_i32 : i32
    %c1_i32 = arith.constant 1 : i32
    %1 = arith.subi %0, %c1_i32 : i32
    %c0_i32 = arith.constant 0 : i32
    %2 = arith.maxsi %1, %c0_i32 : i32
    %c0_i32_0 = arith.constant 0 : i32
    %c0_i32_1 = arith.constant 0 : i32
    return %arg0, %2, %c0_i32_0 : i32, i32, i32
  }
  func.func @transform_2(%arg0: i32, %arg1: i32) -> (i32, i32, i32) {
    %c1_i32 = arith.constant 1 : i32
    %0 = arith.addi %arg1, %c1_i32 : i32
    %c8_i32 = arith.constant 8 : i32
    %1 = arith.muli %0, %c8_i32 : i32
    %c15_i32 = arith.constant 15 : i32
    %2 = arith.minsi %1, %c15_i32 : i32
    %c0_i32 = arith.constant 0 : i32
    %c0_i32_0 = arith.constant 0 : i32
    return %arg0, %2, %c0_i32 : i32, i32, i32
  }
  func.func @transform_3(%arg0: i32, %arg1: i32) -> (i32, i32) {
    %c0_i32 = arith.constant 0 : i32
    %c0_i32_0 = arith.constant 0 : i32
    %c0_i32_1 = arith.constant 0 : i32
    return %c0_i32, %c0_i32_0 : i32, i32
  }
  func.func @transform_4(%arg0: i32, %arg1: i32) -> (i32, i32) {
    %c0_i32 = arith.constant 0 : i32
    %c0_i32_0 = arith.constant 0 : i32
    %c0_i32_1 = arith.constant 0 : i32
    return %c0_i32, %c0_i32_0 : i32, i32
  }
  func.func @transform_5(%arg0: i32, %arg1: i32) -> (i32, i32) {
    %c0_i32 = arith.constant 0 : i32
    %c0_i32_0 = arith.constant 0 : i32
    %c0_i32_1 = arith.constant 0 : i32
    return %c0_i32, %c0_i32_0 : i32, i32
  }
  func.func @transform_6(%arg0: i32, %arg1: i32) -> (i32, i32, i32) {
    %c0_i32 = arith.constant 0 : i32
    %c0_i32_0 = arith.constant 0 : i32
    %c0_i32_1 = arith.constant 0 : i32
    %c0_i32_2 = arith.constant 0 : i32
    return %c0_i32, %c0_i32_0, %c0_i32_1 : i32, i32, i32
  }
  func.func @transform_7(%arg0: i32, %arg1: i32) -> (i32, i32) {
    %c0_i32 = arith.constant 0 : i32
    %c0_i32_0 = arith.constant 0 : i32
    %c0_i32_1 = arith.constant 0 : i32
    return %c0_i32, %c0_i32_0 : i32, i32
  }
  func.func @transform_8(%arg0: i32, %arg1: i32) -> (i32, i32) {
    %c0_i32 = arith.constant 0 : i32
    %c0_i32_0 = arith.constant 0 : i32
    %c0_i32_1 = arith.constant 0 : i32
    return %c0_i32, %c0_i32_0 : i32, i32
  }
  func.func @transform_9(%arg0: i32, %arg1: i32) -> (i32, i32, i32) {
    %c0_i32 = arith.constant 0 : i32
    %c0_i32_0 = arith.constant 0 : i32
    return %arg0, %arg1, %c0_i32 : i32, i32, i32
  }
}

</mosaic_0001>

<llo_original>
// kernel: tpu_custom_call.1
$region0: #{tpu_custom_call.1}
  #allocation0 [shape = 'u32[]', space=smem, size = 0x4, offset = 0x4, fixed_abs, tag = 'smem constant byte address 0x4 - core index']
  #allocation1 [shape = 'u32[144,128]{1,0:T(1,128)}', space=vmem, size = 0x12000, scoped, tag = 'internal scratch']
  #allocation2 [shape = 'bf16[160,384]{1,0:T(16,128)(2,1)}', space=vmem, size = 0x1e000, scoped, tag = 'scratch operand']
  %s0 = inlined_call_operand.hbm [shape: f32[2,256,128], index: 0, kind: input, shape index: {}]
  %s1 = inlined_call_operand.hbm [shape: f32[2,256,128], index: 1, kind: input, shape index: {}]
  %s2 = inlined_call_operand.hbm [shape: f32[2,256,128], index: 2, kind: input, shape index: {}]
  %s3 = inlined_call_operand.hbm [shape: bf16[128,128], index: 3, kind: input, shape index: {}]
  %s4 = inlined_call_operand.vmem [shape: f32[1,128], index: 4, kind: input, shape index: {}]
  %s5 = inlined_call_operand.vmem [shape: f32[1,128], index: 5, kind: input, shape index: {}]
  %s6 = inlined_call_operand.hbm [shape: bf16[3,384,128], index: 6, kind: input, shape index: {}]
  %s7 = inlined_call_operand.vmem [shape: f32[1,128], index: 7, kind: input, shape index: {}]
  %s8 = inlined_call_operand.vmem [shape: f32[1,128], index: 8, kind: input, shape index: {}]
  %s9 = inlined_call_operand.hbm [shape: f32[2,256,128], index: 9, kind: output, shape index: {}]
  %s10 = sld [smem:[#allocation0]]
  $region89: #{tpu_custom_call.1} parent=0
    _
  %s12 = ssub.s32 1, %s10
  %s13 = scalar_select 0, %s12, %s10
  $region1: #{tpu_custom_call.1} parent=0
    #allocation3 [shape = 'u8[131072]{0}', space=vmem, size = 0x20000, scoped, tag = 'input window, operand 0']
    #allocation4 [shape = 's32[2]{0}', space=sflag, size = 0x8, scoped, tag = 'scoped memory for tpu_custom_call.1']
    #allocation5 [shape = 's32[2]{0}', space=sflag, size = 0x8, scoped, tag = 'scoped memory for tpu_custom_call.1']
    #allocation6 [shape = 'u8[16384]{0}', space=vmem, size = 0x4000, scoped, tag = 'input window, operand 1']
    #allocation7 [shape = 's32[2]{0}', space=sflag, size = 0x8, scoped, tag = 'scoped memory for tpu_custom_call.1']
    #allocation8 [shape = 'u8[16384]{0}', space=vmem, size = 0x4000, scoped, tag = 'input window, operand 2']
    #allocation9 [shape = 'u8[32768]{0}', space=vmem, size = 0x8000, scoped, tag = 'input window, operand 3, single buffered']
    #allocation10 [shape = 's32[1]{0}', space=sflag, size = 0x4, scoped, tag = 'scoped memory for tpu_custom_call.1']
    #allocation11 [shape = 'u8[294912]{0}', space=vmem, size = 0x48000, scoped, tag = 'input window, operand 6, single buffered']
    #allocation12 [shape = 'u8[131072]{0}', space=vmem, size = 0x20000, scoped, tag = 'output window, operand 0']
    %14 = vsyncpa [#allocation4], 0
    %s15 = scalar_lea.sflag [#allocation4], 1
    %16 = vsyncpa %s15, 0
    %17 = vsyncpa [#allocation7], 0
    %s18 = scalar_lea.sflag [#allocation7], 1
    %19 = vsyncpa %s18, 0
    %20 = vsyncpa [#allocation10], 0
    %21 = vsyncpa [#allocation5], 0
    %s22 = scalar_lea.sflag [#allocation5], 1
    %23 = vsyncpa %s22, 0
    loop: start=0, step=1, limit=6
    $region2: #{tpu_custom_call.1} parent=1 // loop_pre_header
      _
    $region3: #{tpu_custom_call.1} parent=1 // loop_header
      %s25 = sphi 0, %s29
      %p26 = scmp.ge.s32.totalorder %s25, 6
      %s32 = sphi 0, %s44
      %s33 = sphi 0, %s40
      %s34 = sphi 0, %s32
      %s35 = sphi 0, %s33
      %s36 = sphi 0, %s34
      %s37 = sphi 0, %s35
      %s49 = sphi 0, %s51
      %s52 = sphi 0, %s49
      %s53 = sphi 0, %s52
      %s69 = sphi 0, %s53
      %s85 = sphi 0, %s87
      %s88 = sphi 0, %s85
      %s89 = sphi 0, %s88
      %s105 = sphi 0, %s89
      %s121 = sphi 0, %s123
      %s124 = sphi 0, %s121
      %s125 = sphi 0, %s124
      %s141 = sphi 0, %s125
      %s145 = sphi 0, %s145
      %s147 = sphi 0, %s145
      %s148 = sphi 0, %s147
      %s162 = sphi 0, %s148
      %s166 = sphi 0, %s166
      %s168 = sphi 0, %s166
      %s169 = sphi 0, %s168
      %s183 = sphi 0, %s169
      %s187 = sphi 0, %s187
      %s189 = sphi 0, %s187
      %s190 = sphi 0, %s189
      %s204 = sphi 0, %s190
      %s208 = sphi 0, %s208
      %s210 = sphi 0, %s208
      %s211 = sphi 0, %s210
      %s225 = sphi 0, %s211
      %s229 = sphi 0, %s229
      %s231 = sphi 0, %s229
      %s232 = sphi 0, %s231
      %s246 = sphi 0, %s232
      %s250 = sphi 0, %s250
      %s252 = sphi 0, %s250
      %s253 = sphi 0, %s252
      %s267 = sphi 0, %s253
      %s275 = sphi 0, %s277
      %s278 = sphi 0, %s275
      %s279 = sphi 0, %s278
      %s295 = sphi 0, %s279
    $region4: #{tpu_custom_call.1} parent=1 // loop_header_branch
      %28 = sbr.rel (%p26) target = $region8
    $region5: #{tpu_custom_call.1} parent=1 // loop_body
      %s30 = ssub.s32 %s25, 1
      %s31 = ssub.s32 %s25, 2
      %s38 = sadd.s32 1, %s33
      %p39 = scmp.ge.s32.totalorder %s38, 2
      %s40 = scalar_select %p39, 0, %s38
      %s41 = sadd.s32 1, %s32
      %s42 = scalar_select %p39, %s41, %s32
      %p43 = scmp.ge.s32.totalorder %s42, 2
      %s44 = scalar_select %p43, 0, %s42
      %s45 = ssub.s32 %s32, %s44
      %s46 = ssub.s32 %s33, %s40
      %s47 = sor.u32 %s45, %s46
      %p48 = scmp.eq.s32.totalorder %s47, 0
      %s50 = sadd.s32 %s49, 1
      %s51 = scalar_select %p48, %s49, %s50
      %p54 = pneg %p48
      %p55 = scmp.eq.s32.totalorder %s25, 3
      %p56 = por %p54, %p55
      %p57 = scmp.ne.s32.totalorder %s49, %s52
      %p58 = scmp.eq.s32.totalorder %s25, 0
      %p59 = por %p57, %p58
      %p60 = scmp.ne.s32.totalorder %s49, %s52
      %p61 = scmp.eq.s32.totalorder %s30, 3
      %p62 = por %p60, %p61
      %p63 = scmp.ne.s32.totalorder %s52, %s53
      %p64 = scmp.eq.s32.totalorder %s30, 0
      %p65 = por %p63, %p64
      %p66 = scmp.ne.s32.totalorder %s52, %s53
      %p67 = scmp.eq.s32.totalorder %s31, 3
      %p68 = por %p66, %p67
      %p70 = scmp.ne.s32.totalorder %s53, %s69
      %p71 = scmp.eq.s32.totalorder %s31, 0
      %p72 = por %p70, %p71
      %s73 = smul.u32 %s33, 8
      %s74 = ssub.s32 %s73, 1
      %p75 = scmp.gt.s32.totalorder %s74, 0
      %s76 = scalar_select %p75, %s74, 0
      %s77 = smul.u32 %s40, 8
      %s78 = ssub.s32 %s77, 1
      %p79 = scmp.gt.s32.totalorder %s78, 0
      %s80 = scalar_select %p79, %s78, 0
      %s81 = ssub.s32 %s32, %s44
      %s82 = ssub.s32 %s76, %s80
      %s83 = sor.u32 %s81, %s82
      %p84 = scmp.eq.s32.totalorder %s83, 0
      %s86 = sadd.s32 %s85, 1
      %s87 = scalar_select %p84, %s85, %s86
      %p90 = pneg %p84
      %p91 = scmp.eq.s32.totalorder %s25, 3
      %p92 = por %p90, %p91
      %p93 = scmp.ne.s32.totalorder %s85, %s88
      %p94 = scmp.eq.s32.totalorder %s25, 0
      %p95 = por %p93, %p94
      %p96 = scmp.ne.s32.totalorder %s85, %s88
      %p97 = scmp.eq.s32.totalorder %s30, 3
      %p98 = por %p96, %p97
      %p99 = scmp.ne.s32.totalorder %s88, %s89
      %p100 = scmp.eq.s32.totalorder %s30, 0
      %p101 = por %p99, %p100
      %p102 = scmp.ne.s32.totalorder %s88, %s89
      %p103 = scmp.eq.s32.totalorder %s31, 3
      %p104 = por %p102, %p103
      %p106 = scmp.ne.s32.totalorder %s89, %s105
      %p107 = scmp.eq.s32.totalorder %s31, 0
      %p108 = por %p106, %p107
      %s109 = sadd.s32 %s33, 1
      %s110 = smul.u32 %s109, 8
      %p111 = scmp.lt.s32.totalorder %s110, 15
      %s112 = scalar_select %p111, %s110, 15
      %s113 = sadd.s32 %s40, 1
      %s114 = smul.u32 %s113, 8
      %p115 = scmp.lt.s32.totalorder %s114, 15
      %s116 = scalar_select %p115, %s114, 15
      %s117 = ssub.s32 %s32, %s44
      %s118 = ssub.s32 %s112, %s116
      %s119 = sor.u32 %s117, %s118
      %p120 = scmp.eq.s32.totalorder %s119, 0
      %s122 = sadd.s32 %s121, 1
      %s123 = scalar_select %p120, %s121, %s122
      %p126 = pneg %p120
      %p127 = scmp.eq.s32.totalorder %s25, 3
      %p128 = por %p126, %p127
      %p129 = scmp.ne.s32.totalorder %s121, %s124
      %p130 = scmp.eq.s32.totalorder %s25, 0
      %p131 = por %p129, %p130
      %p132 = scmp.ne.s32.totalorder %s121, %s124
      %p133 = scmp.eq.s32.totalorder %s30, 3
      %p134 = por %p132, %p133
      %p135 = scmp.ne.s32.totalorder %s124, %s125
      %p136 = scmp.eq.s32.totalorder %s30, 0
      %p137 = por %p135, %p136
      %p138 = scmp.ne.s32.totalorder %s124, %s125
      %p139 = scmp.eq.s32.totalorder %s31, 3
      %p140 = por %p138, %p139
      %p142 = scmp.ne.s32.totalorder %s125, %s141
      %p143 = scmp.eq.s32.totalorder %s31, 0
      %p144 = por %p142, %p143
      %s146 = sadd.s32 %s145, 1
      %p149 = scmp.eq.s32.totalorder %s25, 3
      %p150 = scmp.ne.s32.totalorder %s145, %s147
      %p151 = scmp.eq.s32.totalorder %s25, 0
      %p152 = por %p150, %p151
      %p153 = scmp.ne.s32.totalorder %s145, %s147
      %p154 = scmp.eq.s32.totalorder %s30, 3
      %p155 = por %p153, %p154
      %p156 = scmp.ne.s32.totalorder %s147, %s148
      %p157 = scmp.eq.s32.totalorder %s30, 0
      %p158 = por %p156, %p157
      %p159 = scmp.ne.s32.totalorder %s147, %s148
      %p160 = scmp.eq.s32.totalorder %s31, 3
      %p161 = por %p159, %p160
      %p163 = scmp.ne.s32.totalorder %s148, %s162
      %p164 = scmp.eq.s32.totalorder %s31, 0
      %p165 = por %p163, %p164
      %s167 = sadd.s32 %s166, 1
      %p170 = scmp.eq.s32.totalorder %s25, 3
      %p171 = scmp.ne.s32.totalorder %s166, %s168
      %p172 = scmp.eq.s32.totalorder %s25, 0
      %p173 = por %p171, %p172
      %p174 = scmp.ne.s32.totalorder %s166, %s168
      %p175 = scmp.eq.s32.totalorder %s30, 3
      %p176 = por %p174, %p175
      %p177 = scmp.ne.s32.totalorder %s168, %s169
      %p178 = scmp.eq.s32.totalorder %s30, 0
      %p179 = por %p177, %p178
      %p180 = scmp.ne.s32.totalorder %s168, %s169
      %p181 = scmp.eq.s32.totalorder %s31, 3
      %p182 = por %p180, %p181
      %p184 = scmp.ne.s32.totalorder %s169, %s183
      %p185 = scmp.eq.s32.totalorder %s31, 0
      %p186 = por %p184, %p185
      %s188 = sadd.s32 %s187, 1
      %p191 = scmp.eq.s32.totalorder %s25, 3
      %p192 = scmp.ne.s32.totalorder %s187, %s189
      %p193 = scmp.eq.s32.totalorder %s25, 0
      %p194 = por %p192, %p193
      %p195 = scmp.ne.s32.totalorder %s187, %s189
      %p196 = scmp.eq.s32.totalorder %s30, 3
      %p197 = por %p195, %p196
      %p198 = scmp.ne.s32.totalorder %s189, %s190
      %p199 = scmp.eq.s32.totalorder %s30, 0
      %p200 = por %p198, %p199
      %p201 = scmp.ne.s32.totalorder %s189, %s190
      %p202 = scmp.eq.s32.totalorder %s31, 3
      %p203 = por %p201, %p202
      %p205 = scmp.ne.s32.totalorder %s190, %s204
      %p206 = scmp.eq.s32.totalorder %s31, 0
      %p207 = por %p205, %p206
      %s209 = sadd.s32 %s208, 1
      %p212 = scmp.eq.s32.totalorder %s25, 3
      %p213 = scmp.ne.s32.totalorder %s208, %s210
      %p214 = scmp.eq.s32.totalorder %s25, 0
      %p215 = por %p213, %p214
      %p216 = scmp.ne.s32.totalorder %s208, %s210
      %p217 = scmp.eq.s32.totalorder %s30, 3
      %p218 = por %p216, %p217
      %p219 = scmp.ne.s32.totalorder %s210, %s211
      %p220 = scmp.eq.s32.totalorder %s30, 0
      %p221 = por %p219, %p220
      %p222 = scmp.ne.s32.totalorder %s210, %s211
      %p223 = scmp.eq.s32.totalorder %s31, 3
      %p224 = por %p222, %p223
      %p226 = scmp.ne.s32.totalorder %s211, %s225
      %p227 = scmp.eq.s32.totalorder %s31, 0
      %p228 = por %p226, %p227
      %s230 = sadd.s32 %s229, 1
      %p233 = scmp.eq.s32.totalorder %s25, 3
      %p234 = scmp.ne.s32.totalorder %s229, %s231
      %p235 = scmp.eq.s32.totalorder %s25, 0
      %p236 = por %p234, %p235
      %p237 = scmp.ne.s32.totalorder %s229, %s231
      %p238 = scmp.eq.s32.totalorder %s30, 3
      %p239 = por %p237, %p238
      %p240 = scmp.ne.s32.totalorder %s231, %s232
      %p241 = scmp.eq.s32.totalorder %s30, 0
      %p242 = por %p240, %p241
      %p243 = scmp.ne.s32.totalorder %s231, %s232
      %p244 = scmp.eq.s32.totalorder %s31, 3
      %p245 = por %p243, %p244
      %p247 = scmp.ne.s32.totalorder %s232, %s246
      %p248 = scmp.eq.s32.totalorder %s31, 0
      %p249 = por %p247, %p248
      %s251 = sadd.s32 %s250, 1
      %p254 = scmp.eq.s32.totalorder %s25, 3
      %p255 = scmp.ne.s32.totalorder %s250, %s252
      %p256 = scmp.eq.s32.totalorder %s25, 0
      %p257 = por %p255, %p256
      %p258 = scmp.ne.s32.totalorder %s250, %s252
      %p259 = scmp.eq.s32.totalorder %s30, 3
      %p260 = por %p258, %p259
      %p261 = scmp.ne.s32.totalorder %s252, %s253
      %p262 = scmp.eq.s32.totalorder %s30, 0
      %p263 = por %p261, %p262
      %p264 = scmp.ne.s32.totalorder %s252, %s253
      %p265 = scmp.eq.s32.totalorder %s31, 3
      %p266 = por %p264, %p265
      %p268 = scmp.ne.s32.totalorder %s253, %s267
      %p269 = scmp.eq.s32.totalorder %s31, 0
      %p270 = por %p268, %p269
      %s271 = ssub.s32 %s32, %s44
      %s272 = ssub.s32 %s33, %s40
      %s273 = sor.u32 %s271, %s272
      %p274 = scmp.eq.s32.totalorder %s273, 0
      %s276 = sadd.s32 %s275, 1
      %s277 = scalar_select %p274, %s275, %s276
      %p280 = pneg %p274
      %p281 = scmp.eq.s32.totalorder %s25, 3
      %p282 = por %p280, %p281
      %p283 = scmp.ne.s32.totalorder %s275, %s278
      %p284 = scmp.eq.s32.totalorder %s25, 0
      %p285 = por %p283, %p284
      %p286 = scmp.ne.s32.totalorder %s275, %s278
      %p287 = scmp.eq.s32.totalorder %s30, 3
      %p288 = por %p286, %p287
      %p289 = scmp.ne.s32.totalorder %s278, %s279
      %p290 = scmp.eq.s32.totalorder %s30, 0
      %p291 = por %p289, %p290
      %p292 = scmp.ne.s32.totalorder %s278, %s279
      %p293 = scmp.eq.s32.totalorder %s31, 3
      %p294 = por %p292, %p293
      %p296 = scmp.ne.s32.totalorder %s279, %s295
      %p297 = scmp.eq.s32.totalorder %s31, 0
      %p298 = por %p296, %p297
      %p299 = scmp.le.s32.totalorder 1, %s25
      %p300 = scmp.lt.s32.totalorder %s25, 5
      %p301 = pnand %p299, %p300
      %p302 = pneg %p301
      // Predicated region
      $region9: #{tpu_custom_call.1} parent=5 // pred_check
        _
      $region10: #{tpu_custom_call.1} parent=5 // pred_check_branch
        %304 = sbr.rel (%p301) target = $region12
      $region11: #{tpu_custom_call.1} parent=5 // pred_region
        %s305 = ssub.s32 %s25, 1
        // Predicated region
        $region13: #{tpu_custom_call.1} parent=11 // pred_check
          %p306 = pneg %p158
        $region14: #{tpu_custom_call.1} parent=11 // pred_check_branch
          %308 = sbr.rel (%p306) target = $region16
        $region15: #{tpu_custom_call.1} parent=11 // pred_region
          %s310 = ssub.s32 1024, 1024
          %311 = vsyncadd [#allocation10], %s310
          %s312 = sshll.u32 [#allocation9], 4
          %s313 = int_to_ptr.vmem [resolvable:$true] %s312
          %318 = dma.hbm_to_vmem [thread:$0]  %s3, 1024, %s313, [#allocation10], 64, 64, 4
        $region16: #{tpu_custom_call.1} parent=11 // pred_fallthru
          _
        // Predicated region
        $region17: #{tpu_custom_call.1} parent=11 // pred_check
          %p319 = pneg %p179
        $region18: #{tpu_custom_call.1} parent=11 // pred_check_branch
          %321 = sbr.rel (%p319) target = $region20
        $region19: #{tpu_custom_call.1} parent=11 // pred_region
          _
        $region20: #{tpu_custom_call.1} parent=11 // pred_fallthru
          _
        // Predicated region
        $region21: #{tpu_custom_call.1} parent=11 // pred_check
          %p322 = pneg %p200
        $region22: #{tpu_custom_call.1} parent=11 // pred_check_branch
          %324 = sbr.rel (%p322) target = $region24
        $region23: #{tpu_custom_call.1} parent=11 // pred_region
          _
        $region24: #{tpu_custom_call.1} parent=11 // pred_fallthru
          _
        // Predicated region
        $region25: #{tpu_custom_call.1} parent=11 // pred_check
          %p325 = pneg %p221
        $region26: #{tpu_custom_call.1} parent=11 // pred_check_branch
          %327 = sbr.rel (%p325) target = $region28
        $region27: #{tpu_custom_call.1} parent=11 // pred_region
          %s329 = ssub.s32 9216, 9216
          %330 = vsyncadd [#allocation10], %s329
          %s331 = sshll.u32 [#allocation11], 4
          %s332 = int_to_ptr.vmem [resolvable:$true] %s331
          %337 = dma.hbm_to_vmem [thread:$0]  %s6, 9216, %s332, [#allocation10], 64, 64, 4
        $region28: #{tpu_custom_call.1} parent=11 // pred_fallthru
          _
        // Predicated region
        $region29: #{tpu_custom_call.1} parent=11 // pred_check
          %p338 = pneg %p242
        $region30: #{tpu_custom_call.1} parent=11 // pred_check_branch
          %340 = sbr.rel (%p338) target = $region32
        $region31: #{tpu_custom_call.1} parent=11 // pred_region
          _
        $region32: #{tpu_custom_call.1} parent=11 // pred_fallthru
          _
        // Predicated region
        $region33: #{tpu_custom_call.1} parent=11 // pred_check
          %p341 = pneg %p263
        $region34: #{tpu_custom_call.1} parent=11 // pred_check_branch
          %343 = sbr.rel (%p341) target = $region36
        $region35: #{tpu_custom_call.1} parent=11 // pred_region
          _
        $region36: #{tpu_custom_call.1} parent=11 // pred_fallthru
          _
      $region12: #{tpu_custom_call.1} parent=5 // pred_fallthru
        _
      %p344 = scmp.lt.s32.totalorder %s25, 4
      // Predicated region
      $region37: #{tpu_custom_call.1} parent=5 // pred_check
        %p345 = pneg %p344
      $region38: #{tpu_custom_call.1} parent=5 // pred_check_branch
        %347 = sbr.rel (%p345) target = $region40
      $region39: #{tpu_custom_call.1} parent=5 // pred_region
        // Predicated region
        $region41: #{tpu_custom_call.1} parent=39 // pred_check
          %p348 = pneg %p59
        $region42: #{tpu_custom_call.1} parent=39 // pred_check_branch
          %350 = sbr.rel (%p348) target = $region44
        $region43: #{tpu_custom_call.1} parent=39 // pred_region
          %s351 = sand.u32 %s49, 1
          %s352 = scalar_lea.sflag [#allocation4], %s351
          %s353 = sand.u32 %s49, 1
          %s354 = smul.addr %s353, 128
          %s355 = scalar_lea.vmem [#allocation3], %s354
          %s356 = smul.u32 16, %s33
          %s358 = ssub.s32 2048, 2048
          %359 = vsyncadd %s352, %s358
          %s360 = smul.addr %s32, 32
          %s361 = sadd.s32 %s356, %s360
          %s362 = smul.addr %s361, 128
          %s363 = scalar_lea.hbm %s0, %s362
          %s364 = sshll.u32 %s355, 4
          %s365 = int_to_ptr.vmem [resolvable:$true] %s364
          %370 = dma.hbm_to_vmem [thread:$0]  %s363, 2048, %s365, %s352, 128, 128, 8
        $region44: #{tpu_custom_call.1} parent=39 // pred_fallthru
          _
        // Predicated region
        $region45: #{tpu_custom_call.1} parent=39 // pred_check
          %p371 = pneg %p95
        $region46: #{tpu_custom_call.1} parent=39 // pred_check_branch
          %373 = sbr.rel (%p371) target = $region48
        $region47: #{tpu_custom_call.1} parent=39 // pred_region
          %s374 = sand.u32 %s25, 1
          %s375 = scalar_lea.sflag [#allocation7], %s374
          %s376 = sand.u32 %s85, 1
          %s377 = smul.addr %s376, 16
          %s378 = scalar_lea.vmem [#allocation6], %s377
          %s379 = smul.u32 %s33, 8
          %s380 = ssub.s32 %s379, 1
          %p381 = scmp.gt.s32.totalorder %s380, 0
          %s382 = scalar_select %p381, %s380, 0
          %s383 = smul.u32 2, %s382
          %s385 = ssub.s32 256, 256
          %386 = vsyncadd %s375, %s385
          %s387 = smul.addr %s32, 32
          %s388 = sadd.s32 %s383, %s387
          %s389 = smul.addr %s388, 128
          %s390 = scalar_lea.hbm %s1, %s389
          %s391 = sshll.u32 %s378, 4
          %s392 = int_to_ptr.vmem [resolvable:$true] %s391
          %397 = dma.hbm_to_vmem [thread:$0]  %s390, 256, %s392, %s375, 128, 128, 8
        $region48: #{tpu_custom_call.1} parent=39 // pred_fallthru
          _
        // Predicated region
        $region49: #{tpu_custom_call.1} parent=39 // pred_check
          %p398 = pneg %p131
        $region50: #{tpu_custom_call.1} parent=39 // pred_check_branch
          %400 = sbr.rel (%p398) target = $region52
        $region51: #{tpu_custom_call.1} parent=39 // pred_region
          %s401 = sand.u32 %s25, 1
          %s402 = scalar_lea.sflag [#allocation7], %s401
          %s403 = sand.u32 %s121, 1
          %s404 = smul.addr %s403, 16
          %s405 = scalar_lea.vmem [#allocation8], %s404
          %s406 = sadd.s32 %s33, 1
          %s407 = smul.u32 %s406, 8
          %p408 = scmp.lt.s32.totalorder %s407, 15
          %s409 = scalar_select %p408, %s407, 15
          %s410 = smul.u32 2, %s409
          %s412 = ssub.s32 256, 256
          %413 = vsyncadd %s402, %s412
          %s414 = smul.addr %s32, 32
          %s415 = sadd.s32 %s410, %s414
          %s416 = smul.addr %s415, 128
          %s417 = scalar_lea.hbm %s2, %s416
          %s418 = sshll.u32 %s405, 4
          %s419 = int_to_ptr.vmem [resolvable:$true] %s418
          %424 = dma.hbm_to_vmem [thread:$0]  %s417, 256, %s419, %s402, 128, 128, 8
        $region52: #{tpu_custom_call.1} parent=39 // pred_fallthru
          _
      $region40: #{tpu_custom_call.1} parent=5 // pred_fallthru
        _
      %p425 = scmp.le.s32.totalorder 1, %s25
      %p426 = scmp.lt.s32.totalorder %s25, 5
      %p427 = pnand %p425, %p426
      %p428 = pneg %p427
      // Predicated region
      $region53: #{tpu_custom_call.1} parent=5 // pred_check
        _
      $region54: #{tpu_custom_call.1} parent=5 // pred_check_branch
        %430 = sbr.rel (%p427) target = $region56
      $region55: #{tpu_custom_call.1} parent=5 // pred_region
        %s431 = ssub.s32 %s25, 1
        %s432 = sand.u32 %s52, 1
        %s433 = scalar_lea.sflag [#allocation4], %s432
        %s434 = sand.u32 %s52, 1
        %s435 = smul.addr %s434, 128
        %s436 = scalar_lea.vmem [#allocation3], %s435
        // Predicated region
        $region57: #{tpu_custom_call.1} parent=55 // pred_check
          %p437 = pneg %p65
        $region58: #{tpu_custom_call.1} parent=55 // pred_check_branch
          %439 = sbr.rel (%p437) target = $region60
        $region59: #{tpu_custom_call.1} parent=55 // pred_region
          %440 = dma.done %s433, 2048
        $region60: #{tpu_custom_call.1} parent=55 // pred_fallthru
          _
        %s441 = sand.u32 %s30, 1
        %s442 = scalar_lea.sflag [#allocation7], %s441
        %s443 = sand.u32 %s88, 1
        %s444 = smul.addr %s443, 16
        %s445 = scalar_lea.vmem [#allocation6], %s444
        // Predicated region
        $region61: #{tpu_custom_call.1} parent=55 // pred_check
          %p446 = pneg %p101
        $region62: #{tpu_custom_call.1} parent=55 // pred_check_branch
          %448 = sbr.rel (%p446) target = $region64
        $region63: #{tpu_custom_call.1} parent=55 // pred_region
          %449 = dma.done %s442, 256
        $region64: #{tpu_custom_call.1} parent=55 // pred_fallthru
          _
        %s450 = sand.u32 %s30, 1
        %s451 = scalar_lea.sflag [#allocation7], %s450
        %s452 = sand.u32 %s124, 1
        %s453 = smul.addr %s452, 16
        %s454 = scalar_lea.vmem [#allocation8], %s453
        // Predicated region
        $region65: #{tpu_custom_call.1} parent=55 // pred_check
          %p455 = pneg %p137
        $region66: #{tpu_custom_call.1} parent=55 // pred_check_branch
          %457 = sbr.rel (%p455) target = $region68
        $region67: #{tpu_custom_call.1} parent=55 // pred_region
          %458 = dma.done %s451, 256
        $region68: #{tpu_custom_call.1} parent=55 // pred_fallthru
          _
        // Predicated region
        $region69: #{tpu_custom_call.1} parent=55 // pred_check
          %p459 = pneg %p158
        $region70: #{tpu_custom_call.1} parent=55 // pred_check_branch
          %461 = sbr.rel (%p459) target = $region72
        $region71: #{tpu_custom_call.1} parent=55 // pred_region
          %462 = dma.done [#allocation10], 1024
        $region72: #{tpu_custom_call.1} parent=55 // pred_fallthru
          _
        // Predicated region
        $region73: #{tpu_custom_call.1} parent=55 // pred_check
          %p463 = pneg %p221
        $region74: #{tpu_custom_call.1} parent=55 // pred_check_branch
          %465 = sbr.rel (%p463) target = $region76
        $region75: #{tpu_custom_call.1} parent=55 // pred_region
          %466 = dma.done [#allocation10], 9216
        $region76: #{tpu_custom_call.1} parent=55 // pred_fallthru
          _
        %s467 = sand.u32 %s52, 1
        %s468 = scalar_lea.sflag [#allocation4], %s467
        %s469 = sand.u32 %s52, 1
        %s470 = smul.addr %s469, 128
        %s471 = scalar_lea.vmem [#allocation3], %s470
        %p472 = pneg %p65
        %p473 = pneg %p62
        %s474 = sand.u32 %s30, 1
        %s475 = scalar_lea.sflag [#allocation7], %s474
        %s476 = sand.u32 %s88, 1
        %s477 = smul.addr %s476, 16
        %s478 = scalar_lea.vmem [#allocation6], %s477
        %p479 = pneg %p101
        %p480 = pneg %p98
        %s481 = sand.u32 %s30, 1
        %s482 = scalar_lea.sflag [#allocation7], %s481
        %s483 = sand.u32 %s124, 1
        %s484 = smul.addr %s483, 16
        %s485 = scalar_lea.vmem [#allocation8], %s484
        %p486 = pneg %p137
        %p487 = pneg %p134
        %p488 = pneg %p158
        %p489 = pneg %p155
        %p490 = pneg %p179
        %p491 = pneg %p176
        %p492 = pneg %p200
        %p493 = pneg %p197
        %p494 = pneg %p221
        %p495 = pneg %p218
        %p496 = pneg %p242
        %p497 = pneg %p239
        %p498 = pneg %p263
        %p499 = pneg %p260
        %p500 = pneg %p291
        %p501 = pneg %p288
        %s502 = sand.u32 %s278, 1
        %s503 = scalar_lea.sflag [#allocation5], %s502
        %s504 = sand.u32 %s278, 1
        %s505 = smul.addr %s504, 128
        %s506 = scalar_lea.vmem [#allocation12], %s505
        %s507 = smul.u32 16, %s35
        %s508 = smul.u32 %s35, 8
        %s509 = ssub.s32 %s508, 1
        %p510 = scmp.gt.s32.totalorder %s509, 0
        %s511 = scalar_select %p510, %s509, 0
        %s512 = smul.u32 2, %s511
        %s513 = sadd.s32 %s35, 1
        %s514 = smul.u32 %s513, 8
        %p515 = scmp.lt.s32.totalorder %s514, 15
        %s516 = scalar_select %p515, %s514, 15
        %s517 = smul.u32 2, %s516
        %s518 = smul.u32 16, %s35
        %v520 = vld [vmem:[%s436] sm:$0xff]
        %v521 = vld [vmem:[%s436 + $0x8] sm:$0xff]
        %v522 = vld [vmem:[%s436 + $0x10] sm:$0xff]
        %v523 = vld [vmem:[%s436 + $0x18] sm:$0xff]
        %v524 = vld [vmem:[%s436 + $0x20] sm:$0xff]
        %v525 = vld [vmem:[%s436 + $0x28] sm:$0xff]
        %v526 = vld [vmem:[%s436 + $0x30] sm:$0xff]
        %v527 = vld [vmem:[%s436 + $0x38] sm:$0xff]
        %v528 = vld [vmem:[%s436 + $0x40] sm:$0xff]
        %v529 = vld [vmem:[%s436 + $0x48] sm:$0xff]
        %v530 = vld [vmem:[%s436 + $0x50] sm:$0xff]
        %v531 = vld [vmem:[%s436 + $0x58] sm:$0xff]
        %v532 = vld [vmem:[%s436 + $0x60] sm:$0xff]
        %v533 = vld [vmem:[%s436 + $0x68] sm:$0xff]
        %v534 = vld [vmem:[%s436 + $0x70] sm:$0xff]
        %v535 = vld [vmem:[%s436 + $0x78] sm:$0xff]
        %v536 = vpack.c.bf16 %v521, %v520
        %v537 = vpack.c.bf16 %v523, %v522
        %v538 = vpack.c.bf16 %v525, %v524
        %v539 = vpack.c.bf16 %v527, %v526
        %v540 = vpack.c.bf16 %v529, %v528
        %v541 = vpack.c.bf16 %v531, %v530
        %v542 = vpack.c.bf16 %v533, %v532
        %v543 = vpack.c.bf16 %v535, %v534
        %v544 = vld [vmem:[#allocation9] sm:$0xf]
        %v545 = vld [vmem:[#allocation9 + $0x4] sm:$0xf]
        %v546 = vld [vmem:[#allocation9 + $0x8] sm:$0xf]
        %v547 = vld [vmem:[#allocation9 + $0xc] sm:$0xf]
        %v548 = vld [vmem:[#allocation9 + $0x10] sm:$0xf]
        %v549 = vld [vmem:[#allocation9 + $0x14] sm:$0xf]
        %v550 = vld [vmem:[#allocation9 + $0x18] sm:$0xf]
        %v551 = vld [vmem:[#allocation9 + $0x1c] sm:$0xf]
        %v552 = vld [vmem:[#allocation9 + $0x20] sm:$0xf]
        %v553 = vld [vmem:[#allocation9 + $0x24] sm:$0xf]
        %v554 = vld [vmem:[#allocation9 + $0x28] sm:$0xf]
        %v555 = vld [vmem:[#allocation9 + $0x2c] sm:$0xf]
        %v556 = vld [vmem:[#allocation9 + $0x30] sm:$0xf]
        %v557 = vld [vmem:[#allocation9 + $0x34] sm:$0xf]
        %v558 = vld [vmem:[#allocation9 + $0x38] sm:$0xf]
        %v559 = vld [vmem:[#allocation9 + $0x3c] sm:$0xf]
        %v576 = vunpack.c.l.b16 %v544
        %v577 = vunpack.c.l.b16 %v545
        %v578 = vunpack.c.l.b16 %v546
        %v579 = vunpack.c.l.b16 %v547
        %v580 = vunpack.c.l.b16 %v548
        %v581 = vunpack.c.l.b16 %v549
        %v582 = vunpack.c.l.b16 %v550
        %v583 = vunpack.c.l.b16 %v551
        %v584 = vunpack.c.l.b16 %v552
        %v585 = vunpack.c.l.b16 %v553
        %v586 = vunpack.c.l.b16 %v554
        %v587 = vunpack.c.l.b16 %v555
        %v588 = vunpack.c.l.b16 %v556
        %v589 = vunpack.c.l.b16 %v557
        %v590 = vunpack.c.l.b16 %v558
        %v591 = vunpack.c.l.b16 %v559
        %v592 = vpack.c.b16 %v577, %v576
        %v593 = vpack.c.b16 %v579, %v578
        %v594 = vpack.c.b16 %v581, %v580
        %v595 = vpack.c.b16 %v583, %v582
        %v596 = vpack.c.b16 %v585, %v584
        %v597 = vpack.c.b16 %v587, %v586
        %v598 = vpack.c.b16 %v589, %v588
        %v599 = vpack.c.b16 %v591, %v590
        %608 = vmatprep.subr.bf16.mxu0 0
        %609 = vmatpush1.bf16.msra.mxu0 %v592
        %610 = vmatprep.subr.bf16.mxu0 0
        %611 = vmatpush1.bf16.msra.mxu0 %v593
        %612 = vmatprep.subr.bf16.mxu0 0
        %613 = vmatpush1.bf16.msra.mxu0 %v594
        %614 = vmatprep.subr.bf16.mxu0 0
        %615 = vmatpush1.bf16.msra.mxu0 %v595
        %616 = vmatprep.subr.bf16.mxu0 0
        %617 = vmatpush1.bf16.msra.mxu0 %v596
        %618 = vmatprep.subr.bf16.mxu0 0
        %619 = vmatpush1.bf16.msra.mxu0 %v597
        %620 = vmatprep.subr.bf16.mxu0 0
        %621 = vmatpush1.bf16.msra.mxu0 %v598
        %622 = vmatprep.subr.bf16.mxu0 0
        %623 = vmatpush1.bf16.msra.mxu0 %v599
        %624 = vmatprep.subr.bf16.mxu0 0
        %625 = vmatpush1.bf16.msra.mxu0 0
        %626 = vmatprep.subr.bf16.mxu0 0
        %627 = vmatpush1.bf16.msra.mxu0 0
        %628 = vmatprep.subr.bf16.mxu0 0
        %629 = vmatpush1.bf16.msra.mxu0 0
        %630 = vmatprep.subr.bf16.mxu0 0
        %631 = vmatpush1.bf16.msra.mxu0 0
        %632 = vmatprep.subr.bf16.mxu0 0
        %633 = vmatpush1.bf16.msra.mxu0 0
        %634 = vmatprep.subr.bf16.mxu0 0
        %635 = vmatpush1.bf16.msra.mxu0 0
        %636 = vmatprep.subr.bf16.mxu0 0
        %637 = vmatpush1.bf16.msra.mxu0 0
        %638 = vmatprep.subr.bf16.mxu0 0
        %639 = vmatpush1.bf16.msra.mxu0 0
        %640 = vmatprep.mubr.bf16.mxu0 0
        %641 = vmatmul.mubr.bf16.gmra.mrb[0].mxu0 %v536
        %v642 = vpop.f32.mrb[0].mxu0
        %v643 = vadd.f32 0.0, %v642
        %v644 = vpop.f32.mrb[0].mxu0
        %v645 = vpop.f32.mrb[0].mxu0
        %v646 = vadd.f32 0.0, %v645
        %v647 = vpop.f32.mrb[0].mxu0
        %648 = vmatprep.mubr.bf16.mxu0 0
        %649 = vmatmul.mubr.bf16.gmra.mrb[0].mxu0 %v537
        %v650 = vpop.f32.mrb[0].mxu0
        %v651 = vadd.f32 0.0, %v650
        %v652 = vpop.f32.mrb[0].mxu0
        %v653 = vpop.f32.mrb[0].mxu0
        %v654 = vadd.f32 0.0, %v653
        %v655 = vpop.f32.mrb[0].mxu0
        %656 = vmatprep.mubr.bf16.mxu0 0
        %657 = vmatmul.mubr.bf16.gmra.mrb[0].mxu0 %v538
        %v658 = vpop.f32.mrb[0].mxu0
        %v659 = vadd.f32 0.0, %v658
        %v660 = vpop.f32.mrb[0].mxu0
        %v661 = vpop.f32.mrb[0].mxu0
        %v662 = vadd.f32 0.0, %v661
        %v663 = vpop.f32.mrb[0].mxu0
        %664 = vmatprep.mubr.bf16.mxu0 0
        %665 = vmatmul.mubr.bf16.gmra.mrb[0].mxu0 %v539
        %v666 = vpop.f32.mrb[0].mxu0
        %v667 = vadd.f32 0.0, %v666
        %v668 = vpop.f32.mrb[0].mxu0
        %v669 = vpop.f32.mrb[0].mxu0
        %v670 = vadd.f32 0.0, %v669
        %v671 = vpop.f32.mrb[0].mxu0
        %672 = vmatprep.mubr.bf16.mxu0 0
        %673 = vmatmul.mubr.bf16.gmra.mrb[0].mxu0 %v540
        %v674 = vpop.f32.mrb[0].mxu0
        %v675 = vadd.f32 0.0, %v674
        %v676 = vpop.f32.mrb[0].mxu0
        %v677 = vpop.f32.mrb[0].mxu0
        %v678 = vadd.f32 0.0, %v677
        %v679 = vpop.f32.mrb[0].mxu0
        %680 = vmatprep.mubr.bf16.mxu0 0
        %681 = vmatmul.mubr.bf16.gmra.mrb[0].mxu0 %v541
        %v682 = vpop.f32.mrb[0].mxu0
        %v683 = vadd.f32 0.0, %v682
        %v684 = vpop.f32.mrb[0].mxu0
        %v685 = vpop.f32.mrb[0].mxu0
        %v686 = vadd.f32 0.0, %v685
        %v687 = vpop.f32.mrb[0].mxu0
        %688 = vmatprep.mubr.bf16.mxu0 0
        %689 = vmatmul.mubr.bf16.gmra.mrb[0].mxu0 %v542
        %v690 = vpop.f32.mrb[0].mxu0
        %v691 = vadd.f32 0.0, %v690
        %v692 = vpop.f32.mrb[0].mxu0
        %v693 = vpop.f32.mrb[0].mxu0
        %v694 = vadd.f32 0.0, %v693
        %v695 = vpop.f32.mrb[0].mxu0
        %696 = vmatprep.mubr.bf16.mxu0 0
        %697 = vmatmul.mubr.bf16.gmra.mrb[0].mxu0 %v543
        %v698 = vpop.f32.mrb[0].mxu0
        %v699 = vadd.f32 0.0, %v698
        %v700 = vpop.f32.mrb[0].mxu0
        %v701 = vpop.f32.mrb[0].mxu0
        %v702 = vadd.f32 0.0, %v701
        %v703 = vpop.f32.mrb[0].mxu0
        %704 = vdwg.mxu0
        %v705 = vld [vmem:[%s4] sm:$0x1]
        %v707 = vlaneseq
        %v708 = vshrl.u32 %v707, 7
        %v709 = vsub.s32 0, %v708
        %v710 = vrot.slane %v705, %v709
        %v712 = vmul.f32 %v643, %v710
        %v713 = vmul.f32 %v646, %v710
        %v714 = vmul.f32 %v651, %v710
        %v715 = vmul.f32 %v654, %v710
        %v716 = vmul.f32 %v659, %v710
        %v717 = vmul.f32 %v662, %v710
        %v718 = vmul.f32 %v667, %v710
        %v719 = vmul.f32 %v670, %v710
        %v720 = vmul.f32 %v675, %v710
        %v721 = vmul.f32 %v678, %v710
        %v722 = vmul.f32 %v683, %v710
        %v723 = vmul.f32 %v686, %v710
        %v724 = vmul.f32 %v691, %v710
        %v725 = vmul.f32 %v694, %v710
        %v726 = vmul.f32 %v699, %v710
        %v727 = vmul.f32 %v702, %v710
        %v728 = vld [vmem:[%s5] sm:$0x1]
        %v730 = vlaneseq
        %v731 = vshrl.u32 %v730, 7
        %v732 = vsub.s32 0, %v731
        %v733 = vrot.slane %v728, %v732
        %v735 = vadd.f32 %v712, %v733
        %v736 = vadd.f32 %v713, %v733
        %v737 = vadd.f32 %v714, %v733
        %v738 = vadd.f32 %v715, %v733
        %v739 = vadd.f32 %v716, %v733
        %v740 = vadd.f32 %v717, %v733
        %v741 = vadd.f32 %v718, %v733
        %v742 = vadd.f32 %v719, %v733
        %v743 = vadd.f32 %v720, %v733
        %v744 = vadd.f32 %v721, %v733
        %v745 = vadd.f32 %v722, %v733
        %v746 = vadd.f32 %v723, %v733
        %v747 = vadd.f32 %v724, %v733
        %v748 = vadd.f32 %v725, %v733
        %v749 = vadd.f32 %v726, %v733
        %v750 = vadd.f32 %v727, %v733
        %vm751 = vcmp.gt.f32.partialorder %v735, 0.0
        %vm752 = vcmp.gt.f32.partialorder %v736, 0.0
        %vm753 = vcmp.gt.f32.partialorder %v737, 0.0
        %vm754 = vcmp.gt.f32.partialorder %v738, 0.0
        %vm755 = vcmp.gt.f32.partialorder %v739, 0.0
        %vm756 = vcmp.gt.f32.partialorder %v740, 0.0
        %vm757 = vcmp.gt.f32.partialorder %v741, 0.0
        %vm758 = vcmp.gt.f32.partialorder %v742, 0.0
        %vm759 = vcmp.gt.f32.partialorder %v743, 0.0
        %vm760 = vcmp.gt.f32.partialorder %v744, 0.0
        %vm761 = vcmp.gt.f32.partialorder %v745, 0.0
        %vm762 = vcmp.gt.f32.partialorder %v746, 0.0
        %vm763 = vcmp.gt.f32.partialorder %v747, 0.0
        %vm764 = vcmp.gt.f32.partialorder %v748, 0.0
        %vm765 = vcmp.gt.f32.partialorder %v749, 0.0
        %vm766 = vcmp.gt.f32.partialorder %v750, 0.0
        %v767 = vmul.f32 %v735, 0.01
        %v768 = vmul.f32 %v736, 0.01
        %v769 = vmul.f32 %v737, 0.01
        %v770 = vmul.f32 %v738, 0.01
        %v771 = vmul.f32 %v739, 0.01
        %v772 = vmul.f32 %v740, 0.01
        %v773 = vmul.f32 %v741, 0.01
        %v774 = vmul.f32 %v742, 0.01
        %v775 = vmul.f32 %v743, 0.01
        %v776 = vmul.f32 %v744, 0.01
        %v777 = vmul.f32 %v745, 0.01
        %v778 = vmul.f32 %v746, 0.01
        %v779 = vmul.f32 %v747, 0.01
        %v780 = vmul.f32 %v748, 0.01
        %v781 = vmul.f32 %v749, 0.01
        %v782 = vmul.f32 %v750, 0.01
        %v783 = vsel %vm751, %v735, %v767
        %v784 = vsel %vm752, %v736, %v768
        %v785 = vsel %vm753, %v737, %v769
        %v786 = vsel %vm754, %v738, %v770
        %v787 = vsel %vm755, %v739, %v771
        %v788 = vsel %vm756, %v740, %v772
        %v789 = vsel %vm757, %v741, %v773
        %v790 = vsel %vm758, %v742, %v774
        %v791 = vsel %vm759, %v743, %v775
        %v792 = vsel %vm760, %v744, %v776
        %v793 = vsel %vm761, %v745, %v777
        %v794 = vsel %vm762, %v746, %v778
        %v795 = vsel %vm763, %v747, %v779
        %v796 = vsel %vm764, %v748, %v780
        %v797 = vsel %vm765, %v749, %v781
        %v798 = vsel %vm766, %v750, %v782
        %v799 = vlaneseq
        %v800 = vshrl.u32 %v799, 7
        %v801 = vadd.s32 %v800, 8
        %vm802 = vcmp.ge.s32.totalorder %v800, 1
        %vm803 = vcmp.ge.s32.totalorder %v801, 1
        %v804 = vrot.slane %v783, 7
        %v805 = vrot.slane %v784, 7
        %v806 = vrot.slane %v785, 7
        %v807 = vrot.slane %v786, 7
        %v808 = vrot.slane %v787, 7
        %v809 = vrot.slane %v788, 7
        %v810 = vrot.slane %v789, 7
        %v811 = vrot.slane %v790, 7
        %v812 = vrot.slane %v791, 7
        %v813 = vrot.slane %v792, 7
        %v814 = vrot.slane %v793, 7
        %v815 = vrot.slane %v794, 7
        %v816 = vrot.slane %v795, 7
        %v817 = vrot.slane %v796, 7
        %v818 = vrot.slane %v797, 7
        %v819 = vrot.slane %v798, 7
        %vm820 = vcmp.lt.s32.totalorder %v800, 1
        %v821 = vsel %vm820, %v818, %v819
        %v822 = vsel %vm820, %v817, %v818
        %v823 = vsel %vm820, %v816, %v817
        %v824 = vsel %vm820, %v815, %v816
        %v825 = vsel %vm820, %v814, %v815
        %v826 = vsel %vm820, %v813, %v814
        %v827 = vsel %vm820, %v812, %v813
        %v828 = vsel %vm820, %v811, %v812
        %v829 = vsel %vm820, %v810, %v811
        %v830 = vsel %vm820, %v809, %v810
        %v831 = vsel %vm820, %v808, %v809
        %v832 = vsel %vm820, %v807, %v808
        %v833 = vsel %vm820, %v806, %v807
        %v834 = vsel %vm820, %v805, %v806
        %v835 = vsel %vm820, %v804, %v805
        %v836 = vsel %vm820, %v819, %v804
        %v837 = vsel %vm802, %v836, 0.0
        %v838 = vsel %vm803, %v835, 0.0
        %v839 = vsel %vm802, %v834, 0.0
        %v840 = vsel %vm803, %v833, 0.0
        %v841 = vsel %vm802, %v832, 0.0
        %v842 = vsel %vm803, %v831, 0.0
        %v843 = vsel %vm802, %v830, 0.0
        %v844 = vsel %vm803, %v829, 0.0
        %v845 = vsel %vm802, %v828, 0.0
        %v846 = vsel %vm803, %v827, 0.0
        %v847 = vsel %vm802, %v826, 0.0
        %v848 = vsel %vm803, %v825, 0.0
        %v849 = vsel %vm802, %v824, 0.0
        %v850 = vsel %vm803, %v823, 0.0
        %v851 = vsel %vm802, %v822, 0.0
        %v852 = vsel %vm803, %v821, 0.0
        %vm853 = vcmp.lt.s32.totalorder %v800, 15
        %vm854 = vcmp.lt.s32.totalorder %v801, 15
        %v855 = vrot.slane %v783, 1
        %v856 = vrot.slane %v784, 1
        %v857 = vrot.slane %v785, 1
        %v858 = vrot.slane %v786, 1
        %v859 = vrot.slane %v787, 1
        %v860 = vrot.slane %v788, 1
        %v861 = vrot.slane %v789, 1
        %v862 = vrot.slane %v790, 1
        %v863 = vrot.slane %v791, 1
        %v864 = vrot.slane %v792, 1
        %v865 = vrot.slane %v793, 1
        %v866 = vrot.slane %v794, 1
        %v867 = vrot.slane %v795, 1
        %v868 = vrot.slane %v796, 1
        %v869 = vrot.slane %v797, 1
        %v870 = vrot.slane %v798, 1
        %vm871 = vcmp.lt.s32.totalorder %v800, 7
        %v872 = vsel %vm871, %v869, %v870
        %v873 = vsel %vm871, %v868, %v869
        %v874 = vsel %vm871, %v867, %v868
        %v875 = vsel %vm871, %v866, %v867
        %v876 = vsel %vm871, %v865, %v866
        %v877 = vsel %vm871, %v864, %v865
        %v878 = vsel %vm871, %v863, %v864
        %v879 = vsel %vm871, %v862, %v863
        %v880 = vsel %vm871, %v861, %v862
        %v881 = vsel %vm871, %v860, %v861
        %v882 = vsel %vm871, %v859, %v860
        %v883 = vsel %vm871, %v858, %v859
        %v884 = vsel %vm871, %v857, %v858
        %v885 = vsel %vm871, %v856, %v857
        %v886 = vsel %vm871, %v855, %v856
        %v887 = vsel %vm871, %v870, %v855
        %v888 = vsel %vm853, %v886, 0.0
        %v889 = vsel %vm854, %v885, 0.0
        %v890 = vsel %vm853, %v884, 0.0
        %v891 = vsel %vm854, %v883, 0.0
        %v892 = vsel %vm853, %v882, 0.0
        %v893 = vsel %vm854, %v881, 0.0
        %v894 = vsel %vm853, %v880, 0.0
        %v895 = vsel %vm854, %v879, 0.0
        %v896 = vsel %vm853, %v878, 0.0
        %v897 = vsel %vm854, %v877, 0.0
        %v898 = vsel %vm853, %v876, 0.0
        %v899 = vsel %vm854, %v875, 0.0
        %v900 = vsel %vm853, %v874, 0.0
        %v901 = vsel %vm854, %v873, 0.0
        %v902 = vsel %vm853, %v872, 0.0
        %v903 = vsel %vm854, %v887, 0.0
        %v904 = vpack.c.bf16 %v838, %v837
        %v905 = vpack.c.bf16 %v840, %v839
        %v906 = vpack.c.bf16 %v842, %v841
        %v907 = vpack.c.bf16 %v844, %v843
        %v908 = vpack.c.bf16 %v846, %v845
        %v909 = vpack.c.bf16 %v848, %v847
        %v910 = vpack.c.bf16 %v850, %v849
        %v911 = vpack.c.bf16 %v852, %v851
        %912 = vst [vmem:[#allocation2 + $0x18] sm:$0xff] %v904
        %913 = vst [vmem:[#allocation2 + $0x30] sm:$0xff] %v905
        %914 = vst [vmem:[#allocation2 + $0x48] sm:$0xff] %v906
        %915 = vst [vmem:[#allocation2 + $0x60] sm:$0xff] %v907
        %916 = vst [vmem:[#allocation2 + $0x78] sm:$0xff] %v908
        %917 = vst [vmem:[#allocation2 + $0x90] sm:$0xff] %v909
        %918 = vst [vmem:[#allocation2 + $0xa8] sm:$0xff] %v910
        %919 = vst [vmem:[#allocation2 + $0xc0] sm:$0xff] %v911
        %v920 = vpack.c.bf16 %v784, %v783
        %v921 = vpack.c.bf16 %v786, %v785
        %v922 = vpack.c.bf16 %v788, %v787
        %v923 = vpack.c.bf16 %v790, %v789
        %v924 = vpack.c.bf16 %v792, %v791
        %v925 = vpack.c.bf16 %v794, %v793
        %v926 = vpack.c.bf16 %v796, %v795
        %v927 = vpack.c.bf16 %v798, %v797
        %928 = vst [vmem:[#allocation2 + $0x20] sm:$0xff] %v920
        %929 = vst [vmem:[#allocation2 + $0x38] sm:$0xff] %v921
        %930 = vst [vmem:[#allocation2 + $0x50] sm:$0xff] %v922
        %931 = vst [vmem:[#allocation2 + $0x68] sm:$0xff] %v923
        %932 = vst [vmem:[#allocation2 + $0x80] sm:$0xff] %v924
        %933 = vst [vmem:[#allocation2 + $0x98] sm:$0xff] %v925
        %934 = vst [vmem:[#allocation2 + $0xb0] sm:$0xff] %v926
        %935 = vst [vmem:[#allocation2 + $0xc8] sm:$0xff] %v927
        %v936 = vpack.c.bf16 %v889, %v888
        %v937 = vpack.c.bf16 %v891, %v890
        %v938 = vpack.c.bf16 %v893, %v892
        %v939 = vpack.c.bf16 %v895, %v894
        %v940 = vpack.c.bf16 %v897, %v896
        %v941 = vpack.c.bf16 %v899, %v898
        %v942 = vpack.c.bf16 %v901, %v900
        %v943 = vpack.c.bf16 %v903, %v902
        %944 = vst [vmem:[#allocation2 + $0x28] sm:$0xff] %v936
        %945 = vst [vmem:[#allocation2 + $0x40] sm:$0xff] %v937
        %946 = vst [vmem:[#allocation2 + $0x58] sm:$0xff] %v938
        %947 = vst [vmem:[#allocation2 + $0x70] sm:$0xff] %v939
        %948 = vst [vmem:[#allocation2 + $0x88] sm:$0xff] %v940
        %949 = vst [vmem:[#allocation2 + $0xa0] sm:$0xff] %v941
        %950 = vst [vmem:[#allocation2 + $0xb8] sm:$0xff] %v942
        %951 = vst [vmem:[#allocation2 + $0xd0] sm:$0xff] %v943
        %p952 = scmp.gt.s32.totalorder %s35, 0
        %s953 = scalar_select %p952, 1, 0
        %s954 = scvt.s32.f32 %s953
        %p955 = scmp.lt.s32.totalorder %s35, 1
        %s956 = scalar_select %p955, 1, 0
        %s957 = scvt.s32.f32 %s956
        %v958 = vld [vmem:[%s445] sm:$0xff]
        %v959 = vld [vmem:[%s445 + $0x8] sm:$0xff]
        %v960 = vpack.c.bf16 %v959, %v958
        %v961 = vld [vmem:[#allocation9] sm:$0xf]
        %v962 = vld [vmem:[#allocation9 + $0x4] sm:$0xf]
        %v963 = vld [vmem:[#allocation9 + $0x8] sm:$0xf]
        %v964 = vld [vmem:[#allocation9 + $0xc] sm:$0xf]
        %v965 = vld [vmem:[#allocation9 + $0x10] sm:$0xf]
        %v966 = vld [vmem:[#allocation9 + $0x14] sm:$0xf]
        %v967 = vld [vmem:[#allocation9 + $0x18] sm:$0xf]
        %v968 = vld [vmem:[#allocation9 + $0x1c] sm:$0xf]
        %v969 = vld [vmem:[#allocation9 + $0x20] sm:$0xf]
        %v970 = vld [vmem:[#allocation9 + $0x24] sm:$0xf]
        %v971 = vld [vmem:[#allocation9 + $0x28] sm:$0xf]
        %v972 = vld [vmem:[#allocation9 + $0x2c] sm:$0xf]
        %v973 = vld [vmem:[#allocation9 + $0x30] sm:$0xf]
        %v974 = vld [vmem:[#allocation9 + $0x34] sm:$0xf]
        %v975 = vld [vmem:[#allocation9 + $0x38] sm:$0xf]
        %v976 = vld [vmem:[#allocation9 + $0x3c] sm:$0xf]
        %v993 = vunpack.c.l.b16 %v961
        %v994 = vunpack.c.l.b16 %v962
        %v995 = vunpack.c.l.b16 %v963
        %v996 = vunpack.c.l.b16 %v964
        %v997 = vunpack.c.l.b16 %v965
        %v998 = vunpack.c.l.b16 %v966
        %v999 = vunpack.c.l.b16 %v967
        %v1000 = vunpack.c.l.b16 %v968
        %v1001 = vunpack.c.l.b16 %v969
        %v1002 = vunpack.c.l.b16 %v970
        %v1003 = vunpack.c.l.b16 %v971
        %v1004 = vunpack.c.l.b16 %v972
        %v1005 = vunpack.c.l.b16 %v973
        %v1006 = vunpack.c.l.b16 %v974
        %v1007 = vunpack.c.l.b16 %v975
        %v1008 = vunpack.c.l.b16 %v976
        %v1009 = vpack.c.b16 %v994, %v993
        %v1010 = vpack.c.b16 %v996, %v995
        %v1011 = vpack.c.b16 %v998, %v997
        %v1012 = vpack.c.b16 %v1000, %v999
        %v1013 = vpack.c.b16 %v1002, %v1001
        %v1014 = vpack.c.b16 %v1004, %v1003
        %v1015 = vpack.c.b16 %v1006, %v1005
        %v1016 = vpack.c.b16 %v1008, %v1007
        %1025 = vmatprep.subr.bf16.mxu0 0
        %1026 = vmatpush1.bf16.msra.mxu0 %v1009
        %1027 = vmatprep.subr.bf16.mxu0 0
        %1028 = vmatpush1.bf16.msra.mxu0 %v1010
        %1029 = vmatprep.subr.bf16.mxu0 0
        %1030 = vmatpush1.bf16.msra.mxu0 %v1011
        %1031 = vmatprep.subr.bf16.mxu0 0
        %1032 = vmatpush1.bf16.msra.mxu0 %v1012
        %1033 = vmatprep.subr.bf16.mxu0 0
        %1034 = vmatpush1.bf16.msra.mxu0 %v1013
        %1035 = vmatprep.subr.bf16.mxu0 0
        %1036 = vmatpush1.bf16.msra.mxu0 %v1014
        %1037 = vmatprep.subr.bf16.mxu0 0
        %1038 = vmatpush1.bf16.msra.mxu0 %v1015
        %1039 = vmatprep.subr.bf16.mxu0 0
        %1040 = vmatpush1.bf16.msra.mxu0 %v1016
        %1041 = vmatprep.subr.bf16.mxu0 0
        %1042 = vmatpush1.bf16.msra.mxu0 0
        %1043 = vmatprep.subr.bf16.mxu0 0
        %1044 = vmatpush1.bf16.msra.mxu0 0
        %1045 = vmatprep.subr.bf16.mxu0 0
        %1046 = vmatpush1.bf16.msra.mxu0 0
        %1047 = vmatprep.subr.bf16.mxu0 0
        %1048 = vmatpush1.bf16.msra.mxu0 0
        %1049 = vmatprep.subr.bf16.mxu0 0
        %1050 = vmatpush1.bf16.msra.mxu0 0
        %1051 = vmatprep.subr.bf16.mxu0 0
        %1052 = vmatpush1.bf16.msra.mxu0 0
        %1053 = vmatprep.subr.bf16.mxu0 0
        %1054 = vmatpush1.bf16.msra.mxu0 0
        %1055 = vmatprep.subr.bf16.mxu0 0
        %1056 = vmatpush1.bf16.msra.mxu0 0
        %1057 = vmatprep.mubr.bf16.mxu0 0
        %1058 = vmatmul.mubr.bf16.gmra.mrb[0].mxu0 %v960
        %v1059 = vpop.f32.mrb[0].mxu0
        %v1060 = vadd.f32 0.0, %v1059
        %v1061 = vpop.f32.mrb[0].mxu0
        %v1062 = vpop.f32.mrb[0].mxu0
        %v1063 = vadd.f32 0.0, %v1062
        %v1064 = vpop.f32.mrb[0].mxu0
        %1065 = vdwg.mxu0
        %v1066 = vld [vmem:[%s4] sm:$0x1]
        %v1068 = vlaneseq
        %v1069 = vshrl.u32 %v1068, 7
        %v1070 = vsub.s32 0, %v1069
        %v1071 = vrot.slane %v1066, %v1070
        %v1073 = vmul.f32 %v1060, %v1071
        %v1074 = vmul.f32 %v1063, %v1071
        %v1075 = vld [vmem:[%s5] sm:$0x1]
        %v1077 = vlaneseq
        %v1078 = vshrl.u32 %v1077, 7
        %v1079 = vsub.s32 0, %v1078
        %v1080 = vrot.slane %v1075, %v1079
        %v1082 = vadd.f32 %v1073, %v1080
        %v1083 = vadd.f32 %v1074, %v1080
        %vm1084 = vcmp.gt.f32.partialorder %v1082, 0.0
        %vm1085 = vcmp.gt.f32.partialorder %v1083, 0.0
        %v1086 = vmul.f32 %v1082, 0.01
        %v1087 = vmul.f32 %v1083, 0.01
        %v1088 = vsel %vm1084, %v1082, %v1086
        %v1089 = vsel %vm1085, %v1083, %v1087
        %v1090 = vstv %s954
        %v1091 = vmul.f32 %v1088, %v1090
        %v1092 = vmul.f32 %v1089, %v1090
        %v1093 = vrot.slane %v1091, 7
        %v1094 = vrot.slane %v1092, 7
        %v1095 = vsel %vm820, %v1093, %v1094
        %v1096 = vsel %vm820, %v1094, %v1093
        %v1097 = vsel %vm802, %v1096, 0.0
        %v1098 = vsel %vm803, %v1095, 0.0
        %v1099 = vrot.slane %v1091, 1
        %v1100 = vrot.slane %v1092, 1
        %v1101 = vsel %vm871, %v1099, %v1100
        %v1102 = vsel %vm871, %v1100, %v1099
        %v1103 = vsel %vm853, %v1101, 0.0
        %v1104 = vsel %vm854, %v1102, 0.0
        %v1105 = vpack.c.bf16 %v1098, %v1097
        %1106 = vst [vmem:[#allocation2] sm:$0xff] %v1105
        %v1107 = vpack.c.bf16 %v1092, %v1091
        %1108 = vst [vmem:[#allocation2 + $0x8] sm:$0xff] %v1107
        %v1109 = vpack.c.bf16 %v1104, %v1103
        %1110 = vst [vmem:[#allocation2 + $0x10] sm:$0xff] %v1109
        %v1111 = vld [vmem:[%s454] sm:$0xff]
        %v1112 = vld [vmem:[%s454 + $0x8] sm:$0xff]
        %v1113 = vpack.c.bf16 %v1112, %v1111
        %v1114 = vld [vmem:[#allocation9] sm:$0xf]
        %v1115 = vld [vmem:[#allocation9 + $0x4] sm:$0xf]
        %v1116 = vld [vmem:[#allocation9 + $0x8] sm:$0xf]
        %v1117 = vld [vmem:[#allocation9 + $0xc] sm:$0xf]
        %v1118 = vld [vmem:[#allocation9 + $0x10] sm:$0xf]
        %v1119 = vld [vmem:[#allocation9 + $0x14] sm:$0xf]
        %v1120 = vld [vmem:[#allocation9 + $0x18] sm:$0xf]
        %v1121 = vld [vmem:[#allocation9 + $0x1c] sm:$0xf]
        %v1122 = vld [vmem:[#allocation9 + $0x20] sm:$0xf]
        %v1123 = vld [vmem:[#allocation9 + $0x24] sm:$0xf]
        %v1124 = vld [vmem:[#allocation9 + $0x28] sm:$0xf]
        %v1125 = vld [vmem:[#allocation9 + $0x2c] sm:$0xf]
        %v1126 = vld [vmem:[#allocation9 + $0x30] sm:$0xf]
        %v1127 = vld [vmem:[#allocation9 + $0x34] sm:$0xf]
        %v1128 = vld [vmem:[#allocation9 + $0x38] sm:$0xf]
        %v1129 = vld [vmem:[#allocation9 + $0x3c] sm:$0xf]
        %v1146 = vunpack.c.l.b16 %v1114
        %v1147 = vunpack.c.l.b16 %v1115
        %v1148 = vunpack.c.l.b16 %v1116
        %v1149 = vunpack.c.l.b16 %v1117
        %v1150 = vunpack.c.l.b16 %v1118
        %v1151 = vunpack.c.l.b16 %v1119
        %v1152 = vunpack.c.l.b16 %v1120
        %v1153 = vunpack.c.l.b16 %v1121
        %v1154 = vunpack.c.l.b16 %v1122
        %v1155 = vunpack.c.l.b16 %v1123
        %v1156 = vunpack.c.l.b16 %v1124
        %v1157 = vunpack.c.l.b16 %v1125
        %v1158 = vunpack.c.l.b16 %v1126
        %v1159 = vunpack.c.l.b16 %v1127
        %v1160 = vunpack.c.l.b16 %v1128
        %v1161 = vunpack.c.l.b16 %v1129
        %v1162 = vpack.c.b16 %v1147, %v1146
        %v1163 = vpack.c.b16 %v1149, %v1148
        %v1164 = vpack.c.b16 %v1151, %v1150
        %v1165 = vpack.c.b16 %v1153, %v1152
        %v1166 = vpack.c.b16 %v1155, %v1154
        %v1167 = vpack.c.b16 %v1157, %v1156
        %v1168 = vpack.c.b16 %v1159, %v1158
        %v1169 = vpack.c.b16 %v1161, %v1160
        %1178 = vmatprep.subr.bf16.mxu0 0
        %1179 = vmatpush1.bf16.msra.mxu0 %v1162
        %1180 = vmatprep.subr.bf16.mxu0 0
        %1181 = vmatpush1.bf16.msra.mxu0 %v1163
        %1182 = vmatprep.subr.bf16.mxu0 0
        %1183 = vmatpush1.bf16.msra.mxu0 %v1164
        %1184 = vmatprep.subr.bf16.mxu0 0
        %1185 = vmatpush1.bf16.msra.mxu0 %v1165
        %1186 = vmatprep.subr.bf16.mxu0 0
        %1187 = vmatpush1.bf16.msra.mxu0 %v1166
        %1188 = vmatprep.subr.bf16.mxu0 0
        %1189 = vmatpush1.bf16.msra.mxu0 %v1167
        %1190 = vmatprep.subr.bf16.mxu0 0
        %1191 = vmatpush1.bf16.msra.mxu0 %v1168
        %1192 = vmatprep.subr.bf16.mxu0 0
        %1193 = vmatpush1.bf16.msra.mxu0 %v1169
        %1194 = vmatprep.subr.bf16.mxu0 0
        %1195 = vmatpush1.bf16.msra.mxu0 0
        %1196 = vmatprep.subr.bf16.mxu0 0
        %1197 = vmatpush1.bf16.msra.mxu0 0
        %1198 = vmatprep.subr.bf16.mxu0 0
        %1199 = vmatpush1.bf16.msra.mxu0 0
        %1200 = vmatprep.subr.bf16.mxu0 0
        %1201 = vmatpush1.bf16.msra.mxu0 0
        %1202 = vmatprep.subr.bf16.mxu0 0
        %1203 = vmatpush1.bf16.msra.mxu0 0
        %1204 = vmatprep.subr.bf16.mxu0 0
        %1205 = vmatpush1.bf16.msra.mxu0 0
        %1206 = vmatprep.subr.bf16.mxu0 0
        %1207 = vmatpush1.bf16.msra.mxu0 0
        %1208 = vmatprep.subr.bf16.mxu0 0
        %1209 = vmatpush1.bf16.msra.mxu0 0
        %1210 = vmatprep.mubr.bf16.mxu0 0
        %1211 = vmatmul.mubr.bf16.gmra.mrb[0].mxu0 %v1113
        %v1212 = vpop.f32.mrb[0].mxu0
        %v1213 = vadd.f32 0.0, %v1212
        %v1214 = vpop.f32.mrb[0].mxu0
        %v1215 = vpop.f32.mrb[0].mxu0
        %v1216 = vadd.f32 0.0, %v1215
        %v1217 = vpop.f32.mrb[0].mxu0
        %1218 = vdwg.mxu0
        %v1219 = vld [vmem:[%s4] sm:$0x1]
        %v1221 = vlaneseq
        %v1222 = vshrl.u32 %v1221, 7
        %v1223 = vsub.s32 0, %v1222
        %v1224 = vrot.slane %v1219, %v1223
        %v1226 = vmul.f32 %v1213, %v1224
        %v1227 = vmul.f32 %v1216, %v1224
        %v1228 = vld [vmem:[%s5] sm:$0x1]
        %v1230 = vlaneseq
        %v1231 = vshrl.u32 %v1230, 7
        %v1232 = vsub.s32 0, %v1231
        %v1233 = vrot.slane %v1228, %v1232
        %v1235 = vadd.f32 %v1226, %v1233
        %v1236 = vadd.f32 %v1227, %v1233
        %vm1237 = vcmp.gt.f32.partialorder %v1235, 0.0
        %vm1238 = vcmp.gt.f32.partialorder %v1236, 0.0
        %v1239 = vmul.f32 %v1235, 0.01
        %v1240 = vmul.f32 %v1236, 0.01
        %v1241 = vsel %vm1237, %v1235, %v1239
        %v1242 = vsel %vm1238, %v1236, %v1240
        %v1243 = vstv %s957
        %v1244 = vmul.f32 %v1241, %v1243
        %v1245 = vmul.f32 %v1242, %v1243
        %v1246 = vrot.slane %v1244, 7
        %v1247 = vrot.slane %v1245, 7
        %v1248 = vsel %vm820, %v1246, %v1247
        %v1249 = vsel %vm820, %v1247, %v1246
        %v1250 = vsel %vm802, %v1249, 0.0
        %v1251 = vsel %vm803, %v1248, 0.0
        %v1252 = vrot.slane %v1244, 1
        %v1253 = vrot.slane %v1245, 1
        %v1254 = vsel %vm871, %v1252, %v1253
        %v1255 = vsel %vm871, %v1253, %v1252
        %v1256 = vsel %vm853, %v1254, 0.0
        %v1257 = vsel %vm854, %v1255, 0.0
        %v1258 = vpack.c.bf16 %v1251, %v1250
        %1259 = vst [vmem:[#allocation2 + $0xd8] sm:$0xff] %v1258
        %v1260 = vpack.c.bf16 %v1245, %v1244
        %1261 = vst [vmem:[#allocation2 + $0xe0] sm:$0xff] %v1260
        %v1262 = vpack.c.bf16 %v1257, %v1256
        %1263 = vst [vmem:[#allocation2 + $0xe8] sm:$0xff] %v1262
        %v1264 = vld [vmem:[#allocation2] sm:$0xff]
        %v1265 = vld [vmem:[#allocation2 + $0x8] sm:$0xff]
        %v1266 = vld [vmem:[#allocation2 + $0x10] sm:$0xff]
        %v1267 = vld [vmem:[#allocation2 + $0x18] sm:$0xff]
        %v1268 = vld [vmem:[#allocation2 + $0x20] sm:$0xff]
        %v1269 = vld [vmem:[#allocation2 + $0x28] sm:$0xff]
        %v1270 = vld [vmem:[#allocation2 + $0x30] sm:$0xff]
        %v1271 = vld [vmem:[#allocation2 + $0x38] sm:$0xff]
        %v1272 = vld [vmem:[#allocation2 + $0x40] sm:$0xff]
        %v1273 = vld [vmem:[#allocation2 + $0x48] sm:$0xff]
        %v1274 = vld [vmem:[#allocation2 + $0x50] sm:$0xff]
        %v1275 = vld [vmem:[#allocation2 + $0x58] sm:$0xff]
        %v1276 = vld [vmem:[#allocation2 + $0x60] sm:$0xff]
        %v1277 = vld [vmem:[#allocation2 + $0x68] sm:$0xff]
        %v1278 = vld [vmem:[#allocation2 + $0x70] sm:$0xff]
        %v1279 = vld [vmem:[#allocation2 + $0x78] sm:$0xff]
        %v1280 = vld [vmem:[#allocation2 + $0x80] sm:$0xff]
        %v1281 = vld [vmem:[#allocation2 + $0x88] sm:$0xff]
        %v1282 = vld [vmem:[#allocation2 + $0x90] sm:$0xff]
        %v1283 = vld [vmem:[#allocation2 + $0x98] sm:$0xff]
        %v1284 = vld [vmem:[#allocation2 + $0xa0] sm:$0xff]
        %v1285 = vld [vmem:[#allocation2 + $0xa8] sm:$0xff]
        %v1286 = vld [vmem:[#allocation2 + $0xb0] sm:$0xff]
        %v1287 = vld [vmem:[#allocation2 + $0xb8] sm:$0xff]
        %v1288 = vld [vmem:[#allocation11] sm:$0xf]
        %v1289 = vld [vmem:[#allocation11 + $0x4] sm:$0xf]
        %v1290 = vld [vmem:[#allocation11 + $0x8] sm:$0xf]
        %v1291 = vld [vmem:[#allocation11 + $0xc] sm:$0xf]
        %v1292 = vld [vmem:[#allocation11 + $0x10] sm:$0xf]
        %v1293 = vld [vmem:[#allocation11 + $0x14] sm:$0xf]
        %v1294 = vld [vmem:[#allocation11 + $0x18] sm:$0xf]
        %v1295 = vld [vmem:[#allocation11 + $0x1c] sm:$0xf]
        %v1296 = vld [vmem:[#allocation11 + $0x20] sm:$0xf]
        %v1297 = vld [vmem:[#allocation11 + $0x24] sm:$0xf]
        %v1298 = vld [vmem:[#allocation11 + $0x28] sm:$0xf]
        %v1299 = vld [vmem:[#allocation11 + $0x2c] sm:$0xf]
        %v1300 = vld [vmem:[#allocation11 + $0x30] sm:$0xf]
        %v1301 = vld [vmem:[#allocation11 + $0x34] sm:$0xf]
        %v1302 = vld [vmem:[#allocation11 + $0x38] sm:$0xf]
        %v1303 = vld [vmem:[#allocation11 + $0x3c] sm:$0xf]
        %v1304 = vld [vmem:[#allocation11 + $0x40] sm:$0xf]
        %v1305 = vld [vmem:[#allocation11 + $0x44] sm:$0xf]
        %v1306 = vld [vmem:[#allocation11 + $0x48] sm:$0xf]
        %v1307 = vld [vmem:[#allocation11 + $0x4c] sm:$0xf]
        %v1308 = vld [vmem:[#allocation11 + $0x50] sm:$0xf]
        %v1309 = vld [vmem:[#allocation11 + $0x54] sm:$0xf]
        %v1310 = vld [vmem:[#allocation11 + $0x58] sm:$0xf]
        %v1311 = vld [vmem:[#allocation11 + $0x5c] sm:$0xf]
        %v1312 = vld [vmem:[#allocation11 + $0x60] sm:$0xf]
        %v1313 = vld [vmem:[#allocation11 + $0x64] sm:$0xf]
        %v1314 = vld [vmem:[#allocation11 + $0x68] sm:$0xf]
        %v1315 = vld [vmem:[#allocation11 + $0x6c] sm:$0xf]
        %v1316 = vld [vmem:[#allocation11 + $0x70] sm:$0xf]
        %v1317 = vld [vmem:[#allocation11 + $0x74] sm:$0xf]
        %v1318 = vld [vmem:[#allocation11 + $0x78] sm:$0xf]
        %v1319 = vld [vmem:[#allocation11 + $0x7c] sm:$0xf]
        %v1320 = vld [vmem:[#allocation11 + $0x80] sm:$0xf]
        %v1321 = vld [vmem:[#allocation11 + $0x84] sm:$0xf]
        %v1322 = vld [vmem:[#allocation11 + $0x88] sm:$0xf]
        %v1323 = vld [vmem:[#allocation11 + $0x8c] sm:$0xf]
        %v1324 = vld [vmem:[#allocation11 + $0x90] sm:$0xf]
        %v1325 = vld [vmem:[#allocation11 + $0x94] sm:$0xf]
        %v1326 = vld [vmem:[#allocation11 + $0x98] sm:$0xf]
        %v1327 = vld [vmem:[#allocation11 + $0x9c] sm:$0xf]
        %v1328 = vld [vmem:[#allocation11 + $0xa0] sm:$0xf]
        %v1329 = vld [vmem:[#allocation11 + $0xa4] sm:$0xf]
        %v1330 = vld [vmem:[#allocation11 + $0xa8] sm:$0xf]
        %v1331 = vld [vmem:[#allocation11 + $0xac] sm:$0xf]
        %v1332 = vld [vmem:[#allocation11 + $0xb0] sm:$0xf]
        %v1333 = vld [vmem:[#allocation11 + $0xb4] sm:$0xf]
        %v1334 = vld [vmem:[#allocation11 + $0xb8] sm:$0xf]
        %v1335 = vld [vmem:[#allocation11 + $0xbc] sm:$0xf]
        %v1336 = vld [vmem:[#allocation2 + $0xc0] sm:$0xff]
        %v1337 = vld [vmem:[#allocation2 + $0xc8] sm:$0xff]
        %v1338 = vld [vmem:[#allocation2 + $0xd0] sm:$0xff]
        %s1339 = scalar_lea.vmem [#allocation11], 192
        %v1340 = vld [vmem:[%s1339] sm:$0xf]
        %v1341 = vld [vmem:[%s1339 + $0x4] sm:$0xf]
        %v1342 = vld [vmem:[%s1339 + $0x8] sm:$0xf]
        %v1343 = vld [vmem:[%s1339 + $0xc] sm:$0xf]
        %v1344 = vld [vmem:[%s1339 + $0x10] sm:$0xf]
        %v1345 = vld [vmem:[%s1339 + $0x14] sm:$0xf]
        %v1346 = vld [vmem:[%s1339 + $0x18] sm:$0xf]
        %v1347 = vld [vmem:[%s1339 + $0x1c] sm:$0xf]
        %v1348 = vld [vmem:[%s1339 + $0x20] sm:$0xf]
        %v1349 = vld [vmem:[%s1339 + $0x24] sm:$0xf]
        %v1350 = vld [vmem:[%s1339 + $0x28] sm:$0xf]
        %v1351 = vld [vmem:[%s1339 + $0x2c] sm:$0xf]
        %v1352 = vld [vmem:[%s1339 + $0x30] sm:$0xf]
        %v1353 = vld [vmem:[%s1339 + $0x34] sm:$0xf]
        %v1354 = vld [vmem:[%s1339 + $0x38] sm:$0xf]
        %v1355 = vld [vmem:[%s1339 + $0x3c] sm:$0xf]
        %v1356 = vld [vmem:[%s1339 + $0x40] sm:$0xf]
        %v1357 = vld [vmem:[%s1339 + $0x44] sm:$0xf]
        %v1358 = vld [vmem:[%s1339 + $0x48] sm:$0xf]
        %v1359 = vld [vmem:[%s1339 + $0x4c] sm:$0xf]
        %v1360 = vld [vmem:[%s1339 + $0x50] sm:$0xf]
        %v1361 = vld [vmem:[%s1339 + $0x54] sm:$0xf]
        %v1362 = vld [vmem:[%s1339 + $0x58] sm:$0xf]
        %v1363 = vld [vmem:[%s1339 + $0x5c] sm:$0xf]
        %v1364 = vld [vmem:[%s1339 + $0x60] sm:$0xf]
        %v1365 = vld [vmem:[%s1339 + $0x64] sm:$0xf]
        %v1366 = vld [vmem:[%s1339 + $0x68] sm:$0xf]
        %v1367 = vld [vmem:[%s1339 + $0x6c] sm:$0xf]
        %v1368 = vld [vmem:[%s1339 + $0x70] sm:$0xf]
        %v1369 = vld [vmem:[%s1339 + $0x74] sm:$0xf]
        %v1370 = vld [vmem:[%s1339 + $0x78] sm:$0xf]
        %v1371 = vld [vmem:[%s1339 + $0x7c] sm:$0xf]
        %v1372 = vld [vmem:[%s1339 + $0x80] sm:$0xf]
        %v1373 = vld [vmem:[%s1339 + $0x84] sm:$0xf]
        %v1374 = vld [vmem:[%s1339 + $0x88] sm:$0xf]
        %v1375 = vld [vmem:[%s1339 + $0x8c] sm:$0xf]
        %v1376 = vld [vmem:[%s1339 + $0x90] sm:$0xf]
        %v1377 = vld [vmem:[%s1339 + $0x94] sm:$0xf]
        %v1378 = vld [vmem:[%s1339 + $0x98] sm:$0xf]
        %v1379 = vld [vmem:[%s1339 + $0x9c] sm:$0xf]
        %v1380 = vld [vmem:[%s1339 + $0xa0] sm:$0xf]
        %v1381 = vld [vmem:[%s1339 + $0xa4] sm:$0xf]
        %v1382 = vld [vmem:[%s1339 + $0xa8] sm:$0xf]
        %v1383 = vld [vmem:[%s1339 + $0xac] sm:$0xf]
        %v1384 = vld [vmem:[%s1339 + $0xb0] sm:$0xf]
        %v1385 = vld [vmem:[%s1339 + $0xb4] sm:$0xf]
        %v1386 = vld [vmem:[%s1339 + $0xb8] sm:$0xf]
        %v1387 = vld [vmem:[%s1339 + $0xbc] sm:$0xf]
        %v1436 = vunpack.c.l.b16 %v1340
        %v1437 = vunpack.c.l.b16 %v1341
        %v1438 = vunpack.c.l.b16 %v1342
        %v1439 = vunpack.c.l.b16 %v1343
        %v1440 = vunpack.c.l.b16 %v1344
        %v1441 = vunpack.c.l.b16 %v1345
        %v1442 = vunpack.c.l.b16 %v1346
        %v1443 = vunpack.c.l.b16 %v1347
        %v1444 = vunpack.c.l.b16 %v1348
        %v1445 = vunpack.c.l.b16 %v1349
        %v1446 = vunpack.c.l.b16 %v1350
        %v1447 = vunpack.c.l.b16 %v1351
        %v1448 = vunpack.c.l.b16 %v1352
        %v1449 = vunpack.c.l.b16 %v1353
        %v1450 = vunpack.c.l.b16 %v1354
        %v1451 = vunpack.c.l.b16 %v1355
        %v1452 = vunpack.c.l.b16 %v1356
        %v1453 = vunpack.c.l.b16 %v1357
        %v1454 = vunpack.c.l.b16 %v1358
        %v1455 = vunpack.c.l.b16 %v1359
        %v1456 = vunpack.c.l.b16 %v1360
        %v1457 = vunpack.c.l.b16 %v1361
        %v1458 = vunpack.c.l.b16 %v1362
        %v1459 = vunpack.c.l.b16 %v1363
        %v1460 = vunpack.c.l.b16 %v1364
        %v1461 = vunpack.c.l.b16 %v1365
        %v1462 = vunpack.c.l.b16 %v1366
        %v1463 = vunpack.c.l.b16 %v1367
        %v1464 = vunpack.c.l.b16 %v1368
        %v1465 = vunpack.c.l.b16 %v1369
        %v1466 = vunpack.c.l.b16 %v1370
        %v1467 = vunpack.c.l.b16 %v1371
        %v1468 = vunpack.c.l.b16 %v1372
        %v1469 = vunpack.c.l.b16 %v1373
        %v1470 = vunpack.c.l.b16 %v1374
        %v1471 = vunpack.c.l.b16 %v1375
        %v1472 = vunpack.c.l.b16 %v1376
        %v1473 = vunpack.c.l.b16 %v1377
        %v1474 = vunpack.c.l.b16 %v1378
        %v1475 = vunpack.c.l.b16 %v1379
        %v1476 = vunpack.c.l.b16 %v1380
        %v1477 = vunpack.c.l.b16 %v1381
        %v1478 = vunpack.c.l.b16 %v1382
        %v1479 = vunpack.c.l.b16 %v1383
        %v1480 = vunpack.c.l.b16 %v1384
        %v1481 = vunpack.c.l.b16 %v1385
        %v1482 = vunpack.c.l.b16 %v1386
        %v1483 = vunpack.c.l.b16 %v1387
        %v1484 = vpack.c.b16 %v1437, %v1436
        %v1485 = vpack.c.b16 %v1439, %v1438
        %v1486 = vpack.c.b16 %v1441, %v1440
        %v1487 = vpack.c.b16 %v1443, %v1442
        %v1488 = vpack.c.b16 %v1445, %v1444
        %v1489 = vpack.c.b16 %v1447, %v1446
        %v1490 = vpack.c.b16 %v1449, %v1448
        %v1491 = vpack.c.b16 %v1451, %v1450
        %v1492 = vpack.c.b16 %v1453, %v1452
        %v1493 = vpack.c.b16 %v1455, %v1454
        %v1494 = vpack.c.b16 %v1457, %v1456
        %v1495 = vpack.c.b16 %v1459, %v1458
        %v1496 = vpack.c.b16 %v1461, %v1460
        %v1497 = vpack.c.b16 %v1463, %v1462
        %v1498 = vpack.c.b16 %v1465, %v1464
        %v1499 = vpack.c.b16 %v1467, %v1466
        %v1500 = vpack.c.b16 %v1469, %v1468
        %v1501 = vpack.c.b16 %v1471, %v1470
        %v1502 = vpack.c.b16 %v1473, %v1472
        %v1503 = vpack.c.b16 %v1475, %v1474
        %v1504 = vpack.c.b16 %v1477, %v1476
        %v1505 = vpack.c.b16 %v1479, %v1478
        %v1506 = vpack.c.b16 %v1481, %v1480
        %v1507 = vpack.c.b16 %v1483, %v1482
        %1532 = vmatprep.subr.bf16.mxu0 0
        %1533 = vmatpush1.bf16.msra.mxu0 %v1484
        %1534 = vmatprep.subr.bf16.mxu0 0
        %1535 = vmatpush1.bf16.msra.mxu0 %v1485
        %1536 = vmatprep.subr.bf16.mxu0 0
        %1537 = vmatpush1.bf16.msra.mxu0 %v1486
        %1538 = vmatprep.subr.bf16.mxu0 0
        %1539 = vmatpush1.bf16.msra.mxu0 %v1487
        %1540 = vmatprep.subr.bf16.mxu0 0
        %1541 = vmatpush1.bf16.msra.mxu0 %v1488
        %1542 = vmatprep.subr.bf16.mxu0 0
        %1543 = vmatpush1.bf16.msra.mxu0 %v1489
        %1544 = vmatprep.subr.bf16.mxu0 0
        %1545 = vmatpush1.bf16.msra.mxu0 %v1490
        %1546 = vmatprep.subr.bf16.mxu0 0
        %1547 = vmatpush1.bf16.msra.mxu0 %v1491
        %1548 = vmatprep.subr.bf16.mxu0 0
        %1549 = vmatpush1.bf16.msra.mxu0 %v1492
        %1550 = vmatprep.subr.bf16.mxu0 0
        %1551 = vmatpush1.bf16.msra.mxu0 %v1493
        %1552 = vmatprep.subr.bf16.mxu0 0
        %1553 = vmatpush1.bf16.msra.mxu0 %v1494
        %1554 = vmatprep.subr.bf16.mxu0 0
        %1555 = vmatpush1.bf16.msra.mxu0 %v1495
        %1556 = vmatprep.subr.bf16.mxu0 0
        %1557 = vmatpush1.bf16.msra.mxu0 %v1496
        %1558 = vmatprep.subr.bf16.mxu0 0
        %1559 = vmatpush1.bf16.msra.mxu0 %v1497
        %1560 = vmatprep.subr.bf16.mxu0 0
        %1561 = vmatpush1.bf16.msra.mxu0 %v1498
        %1562 = vmatprep.subr.bf16.mxu0 0
        %1563 = vmatpush1.bf16.msra.mxu0 %v1499
        %1564 = vmatprep.mubr.bf16.mxu0 %v1268
        %1565 = vmatmul.mubr.bf16.gmra.mrb[0].mxu0 %v1267
        %v1566 = vpop.f32.mrb[0].mxu0
        %v1567 = vadd.f32 0.0, %v1566
        %v1568 = vpop.f32.mrb[0].mxu0
        %v1569 = vpop.f32.mrb[0].mxu0
        %v1570 = vadd.f32 0.0, %v1569
        %v1571 = vpop.f32.mrb[0].mxu0
        %1572 = vmatprep.mubr.bf16.mxu0 %v1271
        %1573 = vmatmul.mubr.bf16.gmra.mrb[0].mxu0 %v1270
        %v1574 = vpop.f32.mrb[0].mxu0
        %v1575 = vadd.f32 0.0, %v1574
        %v1576 = vpop.f32.mrb[0].mxu0
        %v1577 = vpop.f32.mrb[0].mxu0
        %v1578 = vadd.f32 0.0, %v1577
        %v1579 = vpop.f32.mrb[0].mxu0
        %1580 = vmatprep.mubr.bf16.mxu0 %v1274
        %1581 = vmatmul.mubr.bf16.gmra.mrb[0].mxu0 %v1273
        %v1582 = vpop.f32.mrb[0].mxu0
        %v1583 = vadd.f32 0.0, %v1582
        %v1584 = vpop.f32.mrb[0].mxu0
        %v1585 = vpop.f32.mrb[0].mxu0
        %v1586 = vadd.f32 0.0, %v1585
        %v1587 = vpop.f32.mrb[0].mxu0
        %1588 = vmatprep.mubr.bf16.mxu0 %v1277
        %1589 = vmatmul.mubr.bf16.gmra.mrb[0].mxu0 %v1276
        %v1590 = vpop.f32.mrb[0].mxu0
        %v1591 = vadd.f32 0.0, %v1590
        %v1592 = vpop.f32.mrb[0].mxu0
        %v1593 = vpop.f32.mrb[0].mxu0
        %v1594 = vadd.f32 0.0, %v1593
        %v1595 = vpop.f32.mrb[0].mxu0
        %1596 = vmatprep.mubr.bf16.mxu0 %v1280
        %1597 = vmatmul.mubr.bf16.gmra.mrb[0].mxu0 %v1279
        %v1598 = vpop.f32.mrb[0].mxu0
        %v1599 = vadd.f32 0.0, %v1598
        %v1600 = vpop.f32.mrb[0].mxu0
        %v1601 = vpop.f32.mrb[0].mxu0
        %v1602 = vadd.f32 0.0, %v1601
        %v1603 = vpop.f32.mrb[0].mxu0
        %1604 = vmatprep.mubr.bf16.mxu0 %v1283
        %1605 = vmatmul.mubr.bf16.gmra.mrb[0].mxu0 %v1282
        %v1606 = vpop.f32.mrb[0].mxu0
        %v1607 = vadd.f32 0.0, %v1606
        %v1608 = vpop.f32.mrb[0].mxu0
        %v1609 = vpop.f32.mrb[0].mxu0
        %v1610 = vadd.f32 0.0, %v1609
        %v1611 = vpop.f32.mrb[0].mxu0
        %1612 = vmatprep.mubr.bf16.mxu0 %v1286
        %1613 = vmatmul.mubr.bf16.gmra.mrb[0].mxu0 %v1285
        %v1614 = vpop.f32.mrb[0].mxu0
        %v1615 = vadd.f32 0.0, %v1614
        %v1616 = vpop.f32.mrb[0].mxu0
        %v1617 = vpop.f32.mrb[0].mxu0
        %v1618 = vadd.f32 0.0, %v1617
        %v1619 = vpop.f32.mrb[0].mxu0
        %1620 = vmatprep.mubr.bf16.mxu0 %v1337
        %1621 = vmatmul.mubr.bf16.gmra.mrb[0].mxu0 %v1336
        %v1622 = vpop.f32.mrb[0].mxu0
        %v1623 = vadd.f32 0.0, %v1622
        %v1624 = vpop.f32.mrb[0].mxu0
        %v1625 = vpop.f32.mrb[0].mxu0
        %v1626 = vadd.f32 0.0, %v1625
        %v1627 = vpop.f32.mrb[0].mxu0
        %1628 = vdwg.mxu0
        %1629 = vmatprep.subr.bf16.mxu0 0
        %1630 = vmatpush1.bf16.msra.mxu0 %v1500
        %1631 = vmatprep.subr.bf16.mxu0 0
        %1632 = vmatpush1.bf16.msra.mxu0 %v1501
        %1633 = vmatprep.subr.bf16.mxu0 0
        %1634 = vmatpush1.bf16.msra.mxu0 %v1502
        %1635 = vmatprep.subr.bf16.mxu0 0
        %1636 = vmatpush1.bf16.msra.mxu0 %v1503
        %1637 = vmatprep.subr.bf16.mxu0 0
        %1638 = vmatpush1.bf16.msra.mxu0 %v1504
        %1639 = vmatprep.subr.bf16.mxu0 0
        %1640 = vmatpush1.bf16.msra.mxu0 %v1505
        %1641 = vmatprep.subr.bf16.mxu0 0
        %1642 = vmatpush1.bf16.msra.mxu0 %v1506
        %1643 = vmatprep.subr.bf16.mxu0 0
        %1644 = vmatpush1.bf16.msra.mxu0 %v1507
        %1645 = vmatprep.subr.bf16.mxu0 0
        %1646 = vmatpush1.bf16.msra.mxu0 0
        %1647 = vmatprep.subr.bf16.mxu0 0
        %1648 = vmatpush1.bf16.msra.mxu0 0
        %1649 = vmatprep.subr.bf16.mxu0 0
        %1650 = vmatpush1.bf16.msra.mxu0 0
        %1651 = vmatprep.subr.bf16.mxu0 0
        %1652 = vmatpush1.bf16.msra.mxu0 0
        %1653 = vmatprep.subr.bf16.mxu0 0
        %1654 = vmatpush1.bf16.msra.mxu0 0
        %1655 = vmatprep.subr.bf16.mxu0 0
        %1656 = vmatpush1.bf16.msra.mxu0 0
        %1657 = vmatprep.subr.bf16.mxu0 0
        %1658 = vmatpush1.bf16.msra.mxu0 0
        %1659 = vmatprep.subr.bf16.mxu0 0
        %1660 = vmatpush1.bf16.msra.mxu0 0
        %1661 = vmatprep.mubr.bf16.mxu0 0
        %1662 = vmatmul.mubr.bf16.gmra.mrb[0].mxu0 %v1269
        %v1663 = vpop.f32.mrb[0].mxu0
        %v1664 = vadd.f32 %v1567, %v1663
        %v1665 = vpop.f32.mrb[0].mxu0
        %v1666 = vpop.f32.mrb[0].mxu0
        %v1667 = vadd.f32 %v1570, %v1666
        %v1668 = vpop.f32.mrb[0].mxu0
        %1669 = vmatprep.mubr.bf16.mxu0 0
        %1670 = vmatmul.mubr.bf16.gmra.mrb[0].mxu0 %v1272
        %v1671 = vpop.f32.mrb[0].mxu0
        %v1672 = vadd.f32 %v1575, %v1671
        %v1673 = vpop.f32.mrb[0].mxu0
        %v1674 = vpop.f32.mrb[0].mxu0
        %v1675 = vadd.f32 %v1578, %v1674
        %v1676 = vpop.f32.mrb[0].mxu0
        %1677 = vmatprep.mubr.bf16.mxu0 0
        %1678 = vmatmul.mubr.bf16.gmra.mrb[0].mxu0 %v1275
        %v1679 = vpop.f32.mrb[0].mxu0
        %v1680 = vadd.f32 %v1583, %v1679
        %v1681 = vpop.f32.mrb[0].mxu0
        %v1682 = vpop.f32.mrb[0].mxu0
        %v1683 = vadd.f32 %v1586, %v1682
        %v1684 = vpop.f32.mrb[0].mxu0
        %1685 = vmatprep.mubr.bf16.mxu0 0
        %1686 = vmatmul.mubr.bf16.gmra.mrb[0].mxu0 %v1278
        %v1687 = vpop.f32.mrb[0].mxu0
        %v1688 = vadd.f32 %v1591, %v1687
        %v1689 = vpop.f32.mrb[0].mxu0
        %v1690 = vpop.f32.mrb[0].mxu0
        %v1691 = vadd.f32 %v1594, %v1690
        %v1692 = vpop.f32.mrb[0].mxu0
        %1693 = vmatprep.mubr.bf16.mxu0 0
        %1694 = vmatmul.mubr.bf16.gmra.mrb[0].mxu0 %v1281
        %v1695 = vpop.f32.mrb[0].mxu0
        %v1696 = vadd.f32 %v1599, %v1695
        %v1697 = vpop.f32.mrb[0].mxu0
        %v1698 = vpop.f32.mrb[0].mxu0
        %v1699 = vadd.f32 %v1602, %v1698
        %v1700 = vpop.f32.mrb[0].mxu0
        %1701 = vmatprep.mubr.bf16.mxu0 0
        %1702 = vmatmul.mubr.bf16.gmra.mrb[0].mxu0 %v1284
        %v1703 = vpop.f32.mrb[0].mxu0
        %v1704 = vadd.f32 %v1607, %v1703
        %v1705 = vpop.f32.mrb[0].mxu0
        %v1706 = vpop.f32.mrb[0].mxu0
        %v1707 = vadd.f32 %v1610, %v1706
        %v1708 = vpop.f32.mrb[0].mxu0
        %1709 = vmatprep.mubr.bf16.mxu0 0
        %1710 = vmatmul.mubr.bf16.gmra.mrb[0].mxu0 %v1287
        %v1711 = vpop.f32.mrb[0].mxu0
        %v1712 = vadd.f32 %v1615, %v1711
        %v1713 = vpop.f32.mrb[0].mxu0
        %v1714 = vpop.f32.mrb[0].mxu0
        %v1715 = vadd.f32 %v1618, %v1714
        %v1716 = vpop.f32.mrb[0].mxu0
        %1717 = vmatprep.mubr.bf16.mxu0 0
        %1718 = vmatmul.mubr.bf16.gmra.mrb[0].mxu0 %v1338
        %v1719 = vpop.f32.mrb[0].mxu0
        %v1720 = vadd.f32 %v1623, %v1719
        %v1721 = vpop.f32.mrb[0].mxu0
        %v1722 = vpop.f32.mrb[0].mxu0
        %v1723 = vadd.f32 %v1626, %v1722
        %v1724 = vpop.f32.mrb[0].mxu0
        %1725 = vdwg.mxu0
        %v1774 = vunpack.c.l.b16 %v1288
        %v1775 = vunpack.c.l.b16 %v1289
        %v1776 = vunpack.c.l.b16 %v1290
        %v1777 = vunpack.c.l.b16 %v1291
        %v1778 = vunpack.c.l.b16 %v1292
        %v1779 = vunpack.c.l.b16 %v1293
        %v1780 = vunpack.c.l.b16 %v1294
        %v1781 = vunpack.c.l.b16 %v1295
        %v1782 = vunpack.c.l.b16 %v1296
        %v1783 = vunpack.c.l.b16 %v1297
        %v1784 = vunpack.c.l.b16 %v1298
        %v1785 = vunpack.c.l.b16 %v1299
        %v1786 = vunpack.c.l.b16 %v1300
        %v1787 = vunpack.c.l.b16 %v1301
        %v1788 = vunpack.c.l.b16 %v1302
        %v1789 = vunpack.c.l.b16 %v1303
        %v1790 = vunpack.c.l.b16 %v1304
        %v1791 = vunpack.c.l.b16 %v1305
        %v1792 = vunpack.c.l.b16 %v1306
        %v1793 = vunpack.c.l.b16 %v1307
        %v1794 = vunpack.c.l.b16 %v1308
        %v1795 = vunpack.c.l.b16 %v1309
        %v1796 = vunpack.c.l.b16 %v1310
        %v1797 = vunpack.c.l.b16 %v1311
        %v1798 = vunpack.c.l.b16 %v1312
        %v1799 = vunpack.c.l.b16 %v1313
        %v1800 = vunpack.c.l.b16 %v1314
        %v1801 = vunpack.c.l.b16 %v1315
        %v1802 = vunpack.c.l.b16 %v1316
        %v1803 = vunpack.c.l.b16 %v1317
        %v1804 = vunpack.c.l.b16 %v1318
        %v1805 = vunpack.c.l.b16 %v1319
        %v1806 = vunpack.c.l.b16 %v1320
        %v1807 = vunpack.c.l.b16 %v1321
        %v1808 = vunpack.c.l.b16 %v1322
        %v1809 = vunpack.c.l.b16 %v1323
        %v1810 = vunpack.c.l.b16 %v1324
        %v1811 = vunpack.c.l.b16 %v1325
        %v1812 = vunpack.c.l.b16 %v1326
        %v1813 = vunpack.c.l.b16 %v1327
        %v1814 = vunpack.c.l.b16 %v1328
        %v1815 = vunpack.c.l.b16 %v1329
        %v1816 = vunpack.c.l.b16 %v1330
        %v1817 = vunpack.c.l.b16 %v1331
        %v1818 = vunpack.c.l.b16 %v1332
        %v1819 = vunpack.c.l.b16 %v1333
        %v1820 = vunpack.c.l.b16 %v1334
        %v1821 = vunpack.c.l.b16 %v1335
        %v1822 = vpack.c.b16 %v1775, %v1774
        %v1823 = vpack.c.b16 %v1777, %v1776
        %v1824 = vpack.c.b16 %v1779, %v1778
        %v1825 = vpack.c.b16 %v1781, %v1780
        %v1826 = vpack.c.b16 %v1783, %v1782
        %v1827 = vpack.c.b16 %v1785, %v1784
        %v1828 = vpack.c.b16 %v1787, %v1786
        %v1829 = vpack.c.b16 %v1789, %v1788
        %v1830 = vpack.c.b16 %v1791, %v1790
        %v1831 = vpack.c.b16 %v1793, %v1792
        %v1832 = vpack.c.b16 %v1795, %v1794
        %v1833 = vpack.c.b16 %v1797, %v1796
        %v1834 = vpack.c.b16 %v1799, %v1798
        %v1835 = vpack.c.b16 %v1801, %v1800
        %v1836 = vpack.c.b16 %v1803, %v1802
        %v1837 = vpack.c.b16 %v1805, %v1804
        %v1838 = vpack.c.b16 %v1807, %v1806
        %v1839 = vpack.c.b16 %v1809, %v1808
        %v1840 = vpack.c.b16 %v1811, %v1810
        %v1841 = vpack.c.b16 %v1813, %v1812
        %v1842 = vpack.c.b16 %v1815, %v1814
        %v1843 = vpack.c.b16 %v1817, %v1816
        %v1844 = vpack.c.b16 %v1819, %v1818
        %v1845 = vpack.c.b16 %v1821, %v1820
        %1870 = vmatprep.subr.bf16.mxu0 0
        %1871 = vmatpush1.bf16.msra.mxu0 %v1822
        %1872 = vmatprep.subr.bf16.mxu0 0
        %1873 = vmatpush1.bf16.msra.mxu0 %v1823
        %1874 = vmatprep.subr.bf16.mxu0 0
        %1875 = vmatpush1.bf16.msra.mxu0 %v1824
        %1876 = vmatprep.subr.bf16.mxu0 0
        %1877 = vmatpush1.bf16.msra.mxu0 %v1825
        %1878 = vmatprep.subr.bf16.mxu0 0
        %1879 = vmatpush1.bf16.msra.mxu0 %v1826
        %1880 = vmatprep.subr.bf16.mxu0 0
        %1881 = vmatpush1.bf16.msra.mxu0 %v1827
        %1882 = vmatprep.subr.bf16.mxu0 0
        %1883 = vmatpush1.bf16.msra.mxu0 %v1828
        %1884 = vmatprep.subr.bf16.mxu0 0
        %1885 = vmatpush1.bf16.msra.mxu0 %v1829
        %1886 = vmatprep.subr.bf16.mxu0 0
        %1887 = vmatpush1.bf16.msra.mxu0 %v1830
        %1888 = vmatprep.subr.bf16.mxu0 0
        %1889 = vmatpush1.bf16.msra.mxu0 %v1831
        %1890 = vmatprep.subr.bf16.mxu0 0
        %1891 = vmatpush1.bf16.msra.mxu0 %v1832
        %1892 = vmatprep.subr.bf16.mxu0 0
        %1893 = vmatpush1.bf16.msra.mxu0 %v1833
        %1894 = vmatprep.subr.bf16.mxu0 0
        %1895 = vmatpush1.bf16.msra.mxu0 %v1834
        %1896 = vmatprep.subr.bf16.mxu0 0
        %1897 = vmatpush1.bf16.msra.mxu0 %v1835
        %1898 = vmatprep.subr.bf16.mxu0 0
        %1899 = vmatpush1.bf16.msra.mxu0 %v1836
        %1900 = vmatprep.subr.bf16.mxu0 0
        %1901 = vmatpush1.bf16.msra.mxu0 %v1837
        %1902 = vmatprep.mubr.bf16.mxu0 %v1265
        %1903 = vmatmul.mubr.bf16.gmra.mrb[0].mxu0 %v1264
        %v1904 = vpop.f32.mrb[0].mxu0
        %v1905 = vadd.f32 %v1664, %v1904
        %v1906 = vpop.f32.mrb[0].mxu0
        %v1907 = vpop.f32.mrb[0].mxu0
        %v1908 = vadd.f32 %v1667, %v1907
        %v1909 = vpop.f32.mrb[0].mxu0
        %1910 = vmatprep.mubr.bf16.mxu0 %v1268
        %1911 = vmatmul.mubr.bf16.gmra.mrb[0].mxu0 %v1267
        %v1912 = vpop.f32.mrb[0].mxu0
        %v1913 = vadd.f32 %v1672, %v1912
        %v1914 = vpop.f32.mrb[0].mxu0
        %v1915 = vpop.f32.mrb[0].mxu0
        %v1916 = vadd.f32 %v1675, %v1915
        %v1917 = vpop.f32.mrb[0].mxu0
        %1918 = vmatprep.mubr.bf16.mxu0 %v1271
        %1919 = vmatmul.mubr.bf16.gmra.mrb[0].mxu0 %v1270
        %v1920 = vpop.f32.mrb[0].mxu0
        %v1921 = vadd.f32 %v1680, %v1920
        %v1922 = vpop.f32.mrb[0].mxu0
        %v1923 = vpop.f32.mrb[0].mxu0
        %v1924 = vadd.f32 %v1683, %v1923
        %v1925 = vpop.f32.mrb[0].mxu0
        %1926 = vmatprep.mubr.bf16.mxu0 %v1274
        %1927 = vmatmul.mubr.bf16.gmra.mrb[0].mxu0 %v1273
        %v1928 = vpop.f32.mrb[0].mxu0
        %v1929 = vadd.f32 %v1688, %v1928
        %v1930 = vpop.f32.mrb[0].mxu0
        %v1931 = vpop.f32.mrb[0].mxu0
        %v1932 = vadd.f32 %v1691, %v1931
        %v1933 = vpop.f32.mrb[0].mxu0
        %1934 = vmatprep.mubr.bf16.mxu0 %v1277
        %1935 = vmatmul.mubr.bf16.gmra.mrb[0].mxu0 %v1276
        %v1936 = vpop.f32.mrb[0].mxu0
        %v1937 = vadd.f32 %v1696, %v1936
        %v1938 = vpop.f32.mrb[0].mxu0
        %v1939 = vpop.f32.mrb[0].mxu0
        %v1940 = vadd.f32 %v1699, %v1939
        %v1941 = vpop.f32.mrb[0].mxu0
        %1942 = vmatprep.mubr.bf16.mxu0 %v1280
        %1943 = vmatmul.mubr.bf16.gmra.mrb[0].mxu0 %v1279
        %v1944 = vpop.f32.mrb[0].mxu0
        %v1945 = vadd.f32 %v1704, %v1944
        %v1946 = vpop.f32.mrb[0].mxu0
        %v1947 = vpop.f32.mrb[0].mxu0
        %v1948 = vadd.f32 %v1707, %v1947
        %v1949 = vpop.f32.mrb[0].mxu0
        %1950 = vmatprep.mubr.bf16.mxu0 %v1283
        %1951 = vmatmul.mubr.bf16.gmra.mrb[0].mxu0 %v1282
        %v1952 = vpop.f32.mrb[0].mxu0
        %v1953 = vadd.f32 %v1712, %v1952
        %v1954 = vpop.f32.mrb[0].mxu0
        %v1955 = vpop.f32.mrb[0].mxu0
        %v1956 = vadd.f32 %v1715, %v1955
        %v1957 = vpop.f32.mrb[0].mxu0
        %1958 = vmatprep.mubr.bf16.mxu0 %v1286
        %1959 = vmatmul.mubr.bf16.gmra.mrb[0].mxu0 %v1285
        %v1960 = vpop.f32.mrb[0].mxu0
        %v1961 = vadd.f32 %v1720, %v1960
        %v1962 = vpop.f32.mrb[0].mxu0
        %v1963 = vpop.f32.mrb[0].mxu0
        %v1964 = vadd.f32 %v1723, %v1963
        %v1965 = vpop.f32.mrb[0].mxu0
        %1966 = vdwg.mxu0
        %1967 = vmatprep.subr.bf16.mxu0 0
        %1968 = vmatpush1.bf16.msra.mxu0 %v1838
        %1969 = vmatprep.subr.bf16.mxu0 0
        %1970 = vmatpush1.bf16.msra.mxu0 %v1839
        %1971 = vmatprep.subr.bf16.mxu0 0
        %1972 = vmatpush1.bf16.msra.mxu0 %v1840
        %1973 = vmatprep.subr.bf16.mxu0 0
        %1974 = vmatpush1.bf16.msra.mxu0 %v1841
        %1975 = vmatprep.subr.bf16.mxu0 0
        %1976 = vmatpush1.bf16.msra.mxu0 %v1842
        %1977 = vmatprep.subr.bf16.mxu0 0
        %1978 = vmatpush1.bf16.msra.mxu0 %v1843
        %1979 = vmatprep.subr.bf16.mxu0 0
        %1980 = vmatpush1.bf16.msra.mxu0 %v1844
        %1981 = vmatprep.subr.bf16.mxu0 0
        %1982 = vmatpush1.bf16.msra.mxu0 %v1845
        %1983 = vmatprep.subr.bf16.mxu0 0
        %1984 = vmatpush1.bf16.msra.mxu0 0
        %1985 = vmatprep.subr.bf16.mxu0 0
        %1986 = vmatpush1.bf16.msra.mxu0 0
        %1987 = vmatprep.subr.bf16.mxu0 0
        %1988 = vmatpush1.bf16.msra.mxu0 0
        %1989 = vmatprep.subr.bf16.mxu0 0
        %1990 = vmatpush1.bf16.msra.mxu0 0
        %1991 = vmatprep.subr.bf16.mxu0 0
        %1992 = vmatpush1.bf16.msra.mxu0 0
        %1993 = vmatprep.subr.bf16.mxu0 0
        %1994 = vmatpush1.bf16.msra.mxu0 0
        %1995 = vmatprep.subr.bf16.mxu0 0
        %1996 = vmatpush1.bf16.msra.mxu0 0
        %1997 = vmatprep.subr.bf16.mxu0 0
        %1998 = vmatpush1.bf16.msra.mxu0 0
        %1999 = vmatprep.mubr.bf16.mxu0 0
        %2000 = vmatmul.mubr.bf16.gmra.mrb[0].mxu0 %v1266
        %v2001 = vpop.f32.mrb[0].mxu0
        %v2002 = vadd.f32 %v1905, %v2001
        %v2003 = vpop.f32.mrb[0].mxu0
        %v2004 = vpop.f32.mrb[0].mxu0
        %v2005 = vadd.f32 %v1908, %v2004
        %v2006 = vpop.f32.mrb[0].mxu0
        %2007 = vmatprep.mubr.bf16.mxu0 0
        %2008 = vmatmul.mubr.bf16.gmra.mrb[0].mxu0 %v1269
        %v2009 = vpop.f32.mrb[0].mxu0
        %v2010 = vadd.f32 %v1913, %v2009
        %v2011 = vpop.f32.mrb[0].mxu0
        %v2012 = vpop.f32.mrb[0].mxu0
        %v2013 = vadd.f32 %v1916, %v2012
        %v2014 = vpop.f32.mrb[0].mxu0
        %2015 = vmatprep.mubr.bf16.mxu0 0
        %2016 = vmatmul.mubr.bf16.gmra.mrb[0].mxu0 %v1272
        %v2017 = vpop.f32.mrb[0].mxu0
        %v2018 = vadd.f32 %v1921, %v2017
        %v2019 = vpop.f32.mrb[0].mxu0
        %v2020 = vpop.f32.mrb[0].mxu0
        %v2021 = vadd.f32 %v1924, %v2020
        %v2022 = vpop.f32.mrb[0].mxu0
        %2023 = vmatprep.mubr.bf16.mxu0 0
        %2024 = vmatmul.mubr.bf16.gmra.mrb[0].mxu0 %v1275
        %v2025 = vpop.f32.mrb[0].mxu0
        %v2026 = vadd.f32 %v1929, %v2025
        %v2027 = vpop.f32.mrb[0].mxu0
        %v2028 = vpop.f32.mrb[0].mxu0
        %v2029 = vadd.f32 %v1932, %v2028
        %v2030 = vpop.f32.mrb[0].mxu0
        %2031 = vmatprep.mubr.bf16.mxu0 0
        %2032 = vmatmul.mubr.bf16.gmra.mrb[0].mxu0 %v1278
        %v2033 = vpop.f32.mrb[0].mxu0
        %v2034 = vadd.f32 %v1937, %v2033
        %v2035 = vpop.f32.mrb[0].mxu0
        %v2036 = vpop.f32.mrb[0].mxu0
        %v2037 = vadd.f32 %v1940, %v2036
        %v2038 = vpop.f32.mrb[0].mxu0
        %2039 = vmatprep.mubr.bf16.mxu0 0
        %2040 = vmatmul.mubr.bf16.gmra.mrb[0].mxu0 %v1281
        %v2041 = vpop.f32.mrb[0].mxu0
        %v2042 = vadd.f32 %v1945, %v2041
        %v2043 = vpop.f32.mrb[0].mxu0
        %v2044 = vpop.f32.mrb[0].mxu0
        %v2045 = vadd.f32 %v1948, %v2044
        %v2046 = vpop.f32.mrb[0].mxu0
        %2047 = vmatprep.mubr.bf16.mxu0 0
        %2048 = vmatmul.mubr.bf16.gmra.mrb[0].mxu0 %v1284
        %v2049 = vpop.f32.mrb[0].mxu0
        %v2050 = vadd.f32 %v1953, %v2049
        %v2051 = vpop.f32.mrb[0].mxu0
        %v2052 = vpop.f32.mrb[0].mxu0
        %v2053 = vadd.f32 %v1956, %v2052
        %v2054 = vpop.f32.mrb[0].mxu0
        %2055 = vmatprep.mubr.bf16.mxu0 0
        %2056 = vmatmul.mubr.bf16.gmra.mrb[0].mxu0 %v1287
        %v2057 = vpop.f32.mrb[0].mxu0
        %v2058 = vadd.f32 %v1961, %v2057
        %v2059 = vpop.f32.mrb[0].mxu0
        %v2060 = vpop.f32.mrb[0].mxu0
        %v2061 = vadd.f32 %v1964, %v2060
        %v2062 = vpop.f32.mrb[0].mxu0
        %2063 = vdwg.mxu0
        %v2064 = vld [vmem:[#allocation2 + $0x30] sm:$0xff]
        %v2065 = vld [vmem:[#allocation2 + $0x38] sm:$0xff]
        %v2066 = vld [vmem:[#allocation2 + $0x40] sm:$0xff]
        %v2067 = vld [vmem:[#allocation2 + $0x48] sm:$0xff]
        %v2068 = vld [vmem:[#allocation2 + $0x50] sm:$0xff]
        %v2069 = vld [vmem:[#allocation2 + $0x58] sm:$0xff]
        %v2070 = vld [vmem:[#allocation2 + $0x60] sm:$0xff]
        %v2071 = vld [vmem:[#allocation2 + $0x68] sm:$0xff]
        %v2072 = vld [vmem:[#allocation2 + $0x70] sm:$0xff]
        %v2073 = vld [vmem:[#allocation2 + $0x78] sm:$0xff]
        %v2074 = vld [vmem:[#allocation2 + $0x80] sm:$0xff]
        %v2075 = vld [vmem:[#allocation2 + $0x88] sm:$0xff]
        %v2076 = vld [vmem:[#allocation2 + $0x90] sm:$0xff]
        %v2077 = vld [vmem:[#allocation2 + $0x98] sm:$0xff]
        %v2078 = vld [vmem:[#allocation2 + $0xa0] sm:$0xff]
        %v2079 = vld [vmem:[#allocation2 + $0xa8] sm:$0xff]
        %v2080 = vld [vmem:[#allocation2 + $0xb0] sm:$0xff]
        %v2081 = vld [vmem:[#allocation2 + $0xb8] sm:$0xff]
        %v2082 = vld [vmem:[#allocation2 + $0xc0] sm:$0xff]
        %v2083 = vld [vmem:[#allocation2 + $0xc8] sm:$0xff]
        %v2084 = vld [vmem:[#allocation2 + $0xd0] sm:$0xff]
        %v2085 = vld [vmem:[#allocation2 + $0xd8] sm:$0xff]
        %v2086 = vld [vmem:[#allocation2 + $0xe0] sm:$0xff]
        %v2087 = vld [vmem:[#allocation2 + $0xe8] sm:$0xff]
        %s2088 = scalar_lea.vmem [#allocation11], 384
        %v2089 = vld [vmem:[%s2088] sm:$0xf]
        %v2090 = vld [vmem:[%s2088 + $0x4] sm:$0xf]
        %v2091 = vld [vmem:[%s2088 + $0x8] sm:$0xf]
        %v2092 = vld [vmem:[%s2088 + $0xc] sm:$0xf]
        %v2093 = vld [vmem:[%s2088 + $0x10] sm:$0xf]
        %v2094 = vld [vmem:[%s2088 + $0x14] sm:$0xf]
        %v2095 = vld [vmem:[%s2088 + $0x18] sm:$0xf]
        %v2096 = vld [vmem:[%s2088 + $0x1c] sm:$0xf]
        %v2097 = vld [vmem:[%s2088 + $0x20] sm:$0xf]
        %v2098 = vld [vmem:[%s2088 + $0x24] sm:$0xf]
        %v2099 = vld [vmem:[%s2088 + $0x28] sm:$0xf]
        %v2100 = vld [vmem:[%s2088 + $0x2c] sm:$0xf]
        %v2101 = vld [vmem:[%s2088 + $0x30] sm:$0xf]
        %v2102 = vld [vmem:[%s2088 + $0x34] sm:$0xf]
        %v2103 = vld [vmem:[%s2088 + $0x38] sm:$0xf]
        %v2104 = vld [vmem:[%s2088 + $0x3c] sm:$0xf]
        %v2105 = vld [vmem:[%s2088 + $0x40] sm:$0xf]
        %v2106 = vld [vmem:[%s2088 + $0x44] sm:$0xf]
        %v2107 = vld [vmem:[%s2088 + $0x48] sm:$0xf]
        %v2108 = vld [vmem:[%s2088 + $0x4c] sm:$0xf]
        %v2109 = vld [vmem:[%s2088 + $0x50] sm:$0xf]
        %v2110 = vld [vmem:[%s2088 + $0x54] sm:$0xf]
        %v2111 = vld [vmem:[%s2088 + $0x58] sm:$0xf]
        %v2112 = vld [vmem:[%s2088 + $0x5c] sm:$0xf]
        %v2113 = vld [vmem:[%s2088 + $0x60] sm:$0xf]
        %v2114 = vld [vmem:[%s2088 + $0x64] sm:$0xf]
        %v2115 = vld [vmem:[%s2088 + $0x68] sm:$0xf]
        %v2116 = vld [vmem:[%s2088 + $0x6c] sm:$0xf]
        %v2117 = vld [vmem:[%s2088 + $0x70] sm:$0xf]
        %v2118 = vld [vmem:[%s2088 + $0x74] sm:$0xf]
        %v2119 = vld [vmem:[%s2088 + $0x78] sm:$0xf]
        %v2120 = vld [vmem:[%s2088 + $0x7c] sm:$0xf]
        %v2121 = vld [vmem:[%s2088 + $0x80] sm:$0xf]
        %v2122 = vld [vmem:[%s2088 + $0x84] sm:$0xf]
        %v2123 = vld [vmem:[%s2088 + $0x88] sm:$0xf]
        %v2124 = vld [vmem:[%s2088 + $0x8c] sm:$0xf]
        %v2125 = vld [vmem:[%s2088 + $0x90] sm:$0xf]
        %v2126 = vld [vmem:[%s2088 + $0x94] sm:$0xf]
        %v2127 = vld [vmem:[%s2088 + $0x98] sm:$0xf]
        %v2128 = vld [vmem:[%s2088 + $0x9c] sm:$0xf]
        %v2129 = vld [vmem:[%s2088 + $0xa0] sm:$0xf]
        %v2130 = vld [vmem:[%s2088 + $0xa4] sm:$0xf]
        %v2131 = vld [vmem:[%s2088 + $0xa8] sm:$0xf]
        %v2132 = vld [vmem:[%s2088 + $0xac] sm:$0xf]
        %v2133 = vld [vmem:[%s2088 + $0xb0] sm:$0xf]
        %v2134 = vld [vmem:[%s2088 + $0xb4] sm:$0xf]
        %v2135 = vld [vmem:[%s2088 + $0xb8] sm:$0xf]
        %v2136 = vld [vmem:[%s2088 + $0xbc] sm:$0xf]
        %v2185 = vunpack.c.l.b16 %v2089
        %v2186 = vunpack.c.l.b16 %v2090
        %v2187 = vunpack.c.l.b16 %v2091
        %v2188 = vunpack.c.l.b16 %v2092
        %v2189 = vunpack.c.l.b16 %v2093
        %v2190 = vunpack.c.l.b16 %v2094
        %v2191 = vunpack.c.l.b16 %v2095
        %v2192 = vunpack.c.l.b16 %v2096
        %v2193 = vunpack.c.l.b16 %v2097
        %v2194 = vunpack.c.l.b16 %v2098
        %v2195 = vunpack.c.l.b16 %v2099
        %v2196 = vunpack.c.l.b16 %v2100
        %v2197 = vunpack.c.l.b16 %v2101
        %v2198 = vunpack.c.l.b16 %v2102
        %v2199 = vunpack.c.l.b16 %v2103
        %v2200 = vunpack.c.l.b16 %v2104
        %v2201 = vunpack.c.l.b16 %v2105
        %v2202 = vunpack.c.l.b16 %v2106
        %v2203 = vunpack.c.l.b16 %v2107
        %v2204 = vunpack.c.l.b16 %v2108
        %v2205 = vunpack.c.l.b16 %v2109
        %v2206 = vunpack.c.l.b16 %v2110
        %v2207 = vunpack.c.l.b16 %v2111
        %v2208 = vunpack.c.l.b16 %v2112
        %v2209 = vunpack.c.l.b16 %v2113
        %v2210 = vunpack.c.l.b16 %v2114
        %v2211 = vunpack.c.l.b16 %v2115
        %v2212 = vunpack.c.l.b16 %v2116
        %v2213 = vunpack.c.l.b16 %v2117
        %v2214 = vunpack.c.l.b16 %v2118
        %v2215 = vunpack.c.l.b16 %v2119
        %v2216 = vunpack.c.l.b16 %v2120
        %v2217 = vunpack.c.l.b16 %v2121
        %v2218 = vunpack.c.l.b16 %v2122
        %v2219 = vunpack.c.l.b16 %v2123
        %v2220 = vunpack.c.l.b16 %v2124
        %v2221 = vunpack.c.l.b16 %v2125
        %v2222 = vunpack.c.l.b16 %v2126
        %v2223 = vunpack.c.l.b16 %v2127
        %v2224 = vunpack.c.l.b16 %v2128
        %v2225 = vunpack.c.l.b16 %v2129
        %v2226 = vunpack.c.l.b16 %v2130
        %v2227 = vunpack.c.l.b16 %v2131
        %v2228 = vunpack.c.l.b16 %v2132
        %v2229 = vunpack.c.l.b16 %v2133
        %v2230 = vunpack.c.l.b16 %v2134
        %v2231 = vunpack.c.l.b16 %v2135
        %v2232 = vunpack.c.l.b16 %v2136
        %v2233 = vpack.c.b16 %v2186, %v2185
        %v2234 = vpack.c.b16 %v2188, %v2187
        %v2235 = vpack.c.b16 %v2190, %v2189
        %v2236 = vpack.c.b16 %v2192, %v2191
        %v2237 = vpack.c.b16 %v2194, %v2193
        %v2238 = vpack.c.b16 %v2196, %v2195
        %v2239 = vpack.c.b16 %v2198, %v2197
        %v2240 = vpack.c.b16 %v2200, %v2199
        %v2241 = vpack.c.b16 %v2202, %v2201
        %v2242 = vpack.c.b16 %v2204, %v2203
        %v2243 = vpack.c.b16 %v2206, %v2205
        %v2244 = vpack.c.b16 %v2208, %v2207
        %v2245 = vpack.c.b16 %v2210, %v2209
        %v2246 = vpack.c.b16 %v2212, %v2211
        %v2247 = vpack.c.b16 %v2214, %v2213
        %v2248 = vpack.c.b16 %v2216, %v2215
        %v2249 = vpack.c.b16 %v2218, %v2217
        %v2250 = vpack.c.b16 %v2220, %v2219
        %v2251 = vpack.c.b16 %v2222, %v2221
        %v2252 = vpack.c.b16 %v2224, %v2223
        %v2253 = vpack.c.b16 %v2226, %v2225
        %v2254 = vpack.c.b16 %v2228, %v2227
        %v2255 = vpack.c.b16 %v2230, %v2229
        %v2256 = vpack.c.b16 %v2232, %v2231
        %2281 = vmatprep.subr.bf16.mxu0 0
        %2282 = vmatpush1.bf16.msra.mxu0 %v2233
        %2283 = vmatprep.subr.bf16.mxu0 0
        %2284 = vmatpush1.bf16.msra.mxu0 %v2234
        %2285 = vmatprep.subr.bf16.mxu0 0
        %2286 = vmatpush1.bf16.msra.mxu0 %v2235
        %2287 = vmatprep.subr.bf16.mxu0 0
        %2288 = vmatpush1.bf16.msra.mxu0 %v2236
        %2289 = vmatprep.subr.bf16.mxu0 0
        %2290 = vmatpush1.bf16.msra.mxu0 %v2237
        %2291 = vmatprep.subr.bf16.mxu0 0
        %2292 = vmatpush1.bf16.msra.mxu0 %v2238
        %2293 = vmatprep.subr.bf16.mxu0 0
        %2294 = vmatpush1.bf16.msra.mxu0 %v2239
        %2295 = vmatprep.subr.bf16.mxu0 0
        %2296 = vmatpush1.bf16.msra.mxu0 %v2240
        %2297 = vmatprep.subr.bf16.mxu0 0
        %2298 = vmatpush1.bf16.msra.mxu0 %v2241
        %2299 = vmatprep.subr.bf16.mxu0 0
        %2300 = vmatpush1.bf16.msra.mxu0 %v2242
        %2301 = vmatprep.subr.bf16.mxu0 0
        %2302 = vmatpush1.bf16.msra.mxu0 %v2243
        %2303 = vmatprep.subr.bf16.mxu0 0
        %2304 = vmatpush1.bf16.msra.mxu0 %v2244
        %2305 = vmatprep.subr.bf16.mxu0 0
        %2306 = vmatpush1.bf16.msra.mxu0 %v2245
        %2307 = vmatprep.subr.bf16.mxu0 0
        %2308 = vmatpush1.bf16.msra.mxu0 %v2246
        %2309 = vmatprep.subr.bf16.mxu0 0
        %2310 = vmatpush1.bf16.msra.mxu0 %v2247
        %2311 = vmatprep.subr.bf16.mxu0 0
        %2312 = vmatpush1.bf16.msra.mxu0 %v2248
        %2313 = vmatprep.mubr.bf16.mxu0 %v2065
        %2314 = vmatmul.mubr.bf16.gmra.mrb[0].mxu0 %v2064
        %v2315 = vpop.f32.mrb[0].mxu0
        %v2316 = vadd.f32 0.0, %v2315
        %v2317 = vpop.f32.mrb[0].mxu0
        %v2318 = vpop.f32.mrb[0].mxu0
        %v2319 = vadd.f32 0.0, %v2318
        %v2320 = vpop.f32.mrb[0].mxu0
        %2321 = vmatprep.mubr.bf16.mxu0 %v2068
        %2322 = vmatmul.mubr.bf16.gmra.mrb[0].mxu0 %v2067
        %v2323 = vpop.f32.mrb[0].mxu0
        %v2324 = vadd.f32 0.0, %v2323
        %v2325 = vpop.f32.mrb[0].mxu0
        %v2326 = vpop.f32.mrb[0].mxu0
        %v2327 = vadd.f32 0.0, %v2326
        %v2328 = vpop.f32.mrb[0].mxu0
        %2329 = vmatprep.mubr.bf16.mxu0 %v2071
        %2330 = vmatmul.mubr.bf16.gmra.mrb[0].mxu0 %v2070
        %v2331 = vpop.f32.mrb[0].mxu0
        %v2332 = vadd.f32 0.0, %v2331
        %v2333 = vpop.f32.mrb[0].mxu0
        %v2334 = vpop.f32.mrb[0].mxu0
        %v2335 = vadd.f32 0.0, %v2334
        %v2336 = vpop.f32.mrb[0].mxu0
        %2337 = vmatprep.mubr.bf16.mxu0 %v2074
        %2338 = vmatmul.mubr.bf16.gmra.mrb[0].mxu0 %v2073
        %v2339 = vpop.f32.mrb[0].mxu0
        %v2340 = vadd.f32 0.0, %v2339
        %v2341 = vpop.f32.mrb[0].mxu0
        %v2342 = vpop.f32.mrb[0].mxu0
        %v2343 = vadd.f32 0.0, %v2342
        %v2344 = vpop.f32.mrb[0].mxu0
        %2345 = vmatprep.mubr.bf16.mxu0 %v2077
        %2346 = vmatmul.mubr.bf16.gmra.mrb[0].mxu0 %v2076
        %v2347 = vpop.f32.mrb[0].mxu0
        %v2348 = vadd.f32 0.0, %v2347
        %v2349 = vpop.f32.mrb[0].mxu0
        %v2350 = vpop.f32.mrb[0].mxu0
        %v2351 = vadd.f32 0.0, %v2350
        %v2352 = vpop.f32.mrb[0].mxu0
        %2353 = vmatprep.mubr.bf16.mxu0 %v2080
        %2354 = vmatmul.mubr.bf16.gmra.mrb[0].mxu0 %v2079
        %v2355 = vpop.f32.mrb[0].mxu0
        %v2356 = vadd.f32 0.0, %v2355
        %v2357 = vpop.f32.mrb[0].mxu0
        %v2358 = vpop.f32.mrb[0].mxu0
        %v2359 = vadd.f32 0.0, %v2358
        %v2360 = vpop.f32.mrb[0].mxu0
        %2361 = vmatprep.mubr.bf16.mxu0 %v2083
        %2362 = vmatmul.mubr.bf16.gmra.mrb[0].mxu0 %v2082
        %v2363 = vpop.f32.mrb[0].mxu0
        %v2364 = vadd.f32 0.0, %v2363
        %v2365 = vpop.f32.mrb[0].mxu0
        %v2366 = vpop.f32.mrb[0].mxu0
        %v2367 = vadd.f32 0.0, %v2366
        %v2368 = vpop.f32.mrb[0].mxu0
        %2369 = vmatprep.mubr.bf16.mxu0 %v2086
        %2370 = vmatmul.mubr.bf16.gmra.mrb[0].mxu0 %v2085
        %v2371 = vpop.f32.mrb[0].mxu0
        %v2372 = vadd.f32 0.0, %v2371
        %v2373 = vpop.f32.mrb[0].mxu0
        %v2374 = vpop.f32.mrb[0].mxu0
        %v2375 = vadd.f32 0.0, %v2374
        %v2376 = vpop.f32.mrb[0].mxu0
        %2377 = vdwg.mxu0
        %2378 = vmatprep.subr.bf16.mxu0 0
        %2379 = vmatpush1.bf16.msra.mxu0 %v2249
        %2380 = vmatprep.subr.bf16.mxu0 0
        %2381 = vmatpush1.bf16.msra.mxu0 %v2250
        %2382 = vmatprep.subr.bf16.mxu0 0
        %2383 = vmatpush1.bf16.msra.mxu0 %v2251
        %2384 = vmatprep.subr.bf16.mxu0 0
        %2385 = vmatpush1.bf16.msra.mxu0 %v2252
        %2386 = vmatprep.subr.bf16.mxu0 0
        %2387 = vmatpush1.bf16.msra.mxu0 %v2253
        %2388 = vmatprep.subr.bf16.mxu0 0
        %2389 = vmatpush1.bf16.msra.mxu0 %v2254
        %2390 = vmatprep.subr.bf16.mxu0 0
        %2391 = vmatpush1.bf16.msra.mxu0 %v2255
        %2392 = vmatprep.subr.bf16.mxu0 0
        %2393 = vmatpush1.bf16.msra.mxu0 %v2256
        %2394 = vmatprep.subr.bf16.mxu0 0
        %2395 = vmatpush1.bf16.msra.mxu0 0
        %2396 = vmatprep.subr.bf16.mxu0 0
        %2397 = vmatpush1.bf16.msra.mxu0 0
        %2398 = vmatprep.subr.bf16.mxu0 0
        %2399 = vmatpush1.bf16.msra.mxu0 0
        %2400 = vmatprep.subr.bf16.mxu0 0
        %2401 = vmatpush1.bf16.msra.mxu0 0
        %2402 = vmatprep.subr.bf16.mxu0 0
        %2403 = vmatpush1.bf16.msra.mxu0 0
        %2404 = vmatprep.subr.bf16.mxu0 0
        %2405 = vmatpush1.bf16.msra.mxu0 0
        %2406 = vmatprep.subr.bf16.mxu0 0
        %2407 = vmatpush1.bf16.msra.mxu0 0
        %2408 = vmatprep.subr.bf16.mxu0 0
        %2409 = vmatpush1.bf16.msra.mxu0 0
        %2410 = vmatprep.mubr.bf16.mxu0 0
        %2411 = vmatmul.mubr.bf16.gmra.mrb[0].mxu0 %v2066
        %v2412 = vpop.f32.mrb[0].mxu0
        %v2413 = vadd.f32 %v2316, %v2412
        %v2414 = vpop.f32.mrb[0].mxu0
        %v2415 = vpop.f32.mrb[0].mxu0
        %v2416 = vadd.f32 %v2319, %v2415
        %v2417 = vpop.f32.mrb[0].mxu0
        %2418 = vmatprep.mubr.bf16.mxu0 0
        %2419 = vmatmul.mubr.bf16.gmra.mrb[0].mxu0 %v2069
        %v2420 = vpop.f32.mrb[0].mxu0
        %v2421 = vadd.f32 %v2324, %v2420
        %v2422 = vpop.f32.mrb[0].mxu0
        %v2423 = vpop.f32.mrb[0].mxu0
        %v2424 = vadd.f32 %v2327, %v2423
        %v2425 = vpop.f32.mrb[0].mxu0
        %2426 = vmatprep.mubr.bf16.mxu0 0
        %2427 = vmatmul.mubr.bf16.gmra.mrb[0].mxu0 %v2072
        %v2428 = vpop.f32.mrb[0].mxu0
        %v2429 = vadd.f32 %v2332, %v2428
        %v2430 = vpop.f32.mrb[0].mxu0
        %v2431 = vpop.f32.mrb[0].mxu0
        %v2432 = vadd.f32 %v2335, %v2431
        %v2433 = vpop.f32.mrb[0].mxu0
        %2434 = vmatprep.mubr.bf16.mxu0 0
        %2435 = vmatmul.mubr.bf16.gmra.mrb[0].mxu0 %v2075
        %v2436 = vpop.f32.mrb[0].mxu0
        %v2437 = vadd.f32 %v2340, %v2436
        %v2438 = vpop.f32.mrb[0].mxu0
        %v2439 = vpop.f32.mrb[0].mxu0
        %v2440 = vadd.f32 %v2343, %v2439
        %v2441 = vpop.f32.mrb[0].mxu0
        %2442 = vmatprep.mubr.bf16.mxu0 0
        %2443 = vmatmul.mubr.bf16.gmra.mrb[0].mxu0 %v2078
        %v2444 = vpop.f32.mrb[0].mxu0
        %v2445 = vadd.f32 %v2348, %v2444
        %v2446 = vpop.f32.mrb[0].mxu0
        %v2447 = vpop.f32.mrb[0].mxu0
        %v2448 = vadd.f32 %v2351, %v2447
        %v2449 = vpop.f32.mrb[0].mxu0
        %2450 = vmatprep.mubr.bf16.mxu0 0
        %2451 = vmatmul.mubr.bf16.gmra.mrb[0].mxu0 %v2081
        %v2452 = vpop.f32.mrb[0].mxu0
        %v2453 = vadd.f32 %v2356, %v2452
        %v2454 = vpop.f32.mrb[0].mxu0
        %v2455 = vpop.f32.mrb[0].mxu0
        %v2456 = vadd.f32 %v2359, %v2455
        %v2457 = vpop.f32.mrb[0].mxu0
        %2458 = vmatprep.mubr.bf16.mxu0 0
        %2459 = vmatmul.mubr.bf16.gmra.mrb[0].mxu0 %v2084
        %v2460 = vpop.f32.mrb[0].mxu0
        %v2461 = vadd.f32 %v2364, %v2460
        %v2462 = vpop.f32.mrb[0].mxu0
        %v2463 = vpop.f32.mrb[0].mxu0
        %v2464 = vadd.f32 %v2367, %v2463
        %v2465 = vpop.f32.mrb[0].mxu0
        %2466 = vmatprep.mubr.bf16.mxu0 0
        %2467 = vmatmul.mubr.bf16.gmra.mrb[0].mxu0 %v2087
        %v2468 = vpop.f32.mrb[0].mxu0
        %v2469 = vadd.f32 %v2372, %v2468
        %v2470 = vpop.f32.mrb[0].mxu0
        %v2471 = vpop.f32.mrb[0].mxu0
        %v2472 = vadd.f32 %v2375, %v2471
        %v2473 = vpop.f32.mrb[0].mxu0
        %2474 = vdwg.mxu0
        %v2475 = vadd.f32 %v2002, %v2413
        %v2476 = vadd.f32 %v2005, %v2416
        %v2477 = vadd.f32 %v2010, %v2421
        %v2478 = vadd.f32 %v2013, %v2424
        %v2479 = vadd.f32 %v2018, %v2429
        %v2480 = vadd.f32 %v2021, %v2432
        %v2481 = vadd.f32 %v2026, %v2437
        %v2482 = vadd.f32 %v2029, %v2440
        %v2483 = vadd.f32 %v2034, %v2445
        %v2484 = vadd.f32 %v2037, %v2448
        %v2485 = vadd.f32 %v2042, %v2453
        %v2486 = vadd.f32 %v2045, %v2456
        %v2487 = vadd.f32 %v2050, %v2461
        %v2488 = vadd.f32 %v2053, %v2464
        %v2489 = vadd.f32 %v2058, %v2469
        %v2490 = vadd.f32 %v2061, %v2472
        %v2491 = vld [vmem:[%s7] sm:$0x1]
        %v2493 = vlaneseq
        %v2494 = vshrl.u32 %v2493, 7
        %v2495 = vsub.s32 0, %v2494
        %v2496 = vrot.slane %v2491, %v2495
        %v2498 = vmul.f32 %v2475, %v2496
        %v2499 = vmul.f32 %v2476, %v2496
        %v2500 = vmul.f32 %v2477, %v2496
        %v2501 = vmul.f32 %v2478, %v2496
        %v2502 = vmul.f32 %v2479, %v2496
        %v2503 = vmul.f32 %v2480, %v2496
        %v2504 = vmul.f32 %v2481, %v2496
        %v2505 = vmul.f32 %v2482, %v2496
        %v2506 = vmul.f32 %v2483, %v2496
        %v2507 = vmul.f32 %v2484, %v2496
        %v2508 = vmul.f32 %v2485, %v2496
        %v2509 = vmul.f32 %v2486, %v2496
        %v2510 = vmul.f32 %v2487, %v2496
        %v2511 = vmul.f32 %v2488, %v2496
        %v2512 = vmul.f32 %v2489, %v2496
        %v2513 = vmul.f32 %v2490, %v2496
        %v2514 = vld [vmem:[%s8] sm:$0x1]
        %v2516 = vlaneseq
        %v2517 = vshrl.u32 %v2516, 7
        %v2518 = vsub.s32 0, %v2517
        %v2519 = vrot.slane %v2514, %v2518
        %v2521 = vadd.f32 %v2498, %v2519
        %v2522 = vadd.f32 %v2499, %v2519
        %v2523 = vadd.f32 %v2500, %v2519
        %v2524 = vadd.f32 %v2501, %v2519
        %v2525 = vadd.f32 %v2502, %v2519
        %v2526 = vadd.f32 %v2503, %v2519
        %v2527 = vadd.f32 %v2504, %v2519
        %v2528 = vadd.f32 %v2505, %v2519
        %v2529 = vadd.f32 %v2506, %v2519
        %v2530 = vadd.f32 %v2507, %v2519
        %v2531 = vadd.f32 %v2508, %v2519
        %v2532 = vadd.f32 %v2509, %v2519
        %v2533 = vadd.f32 %v2510, %v2519
        %v2534 = vadd.f32 %v2511, %v2519
        %v2535 = vadd.f32 %v2512, %v2519
        %v2536 = vadd.f32 %v2513, %v2519
        %vm2537 = vcmp.gt.f32.partialorder %v2521, 0.0
        %vm2538 = vcmp.gt.f32.partialorder %v2522, 0.0
        %vm2539 = vcmp.gt.f32.partialorder %v2523, 0.0
        %vm2540 = vcmp.gt.f32.partialorder %v2524, 0.0
        %vm2541 = vcmp.gt.f32.partialorder %v2525, 0.0
        %vm2542 = vcmp.gt.f32.partialorder %v2526, 0.0
        %vm2543 = vcmp.gt.f32.partialorder %v2527, 0.0
        %vm2544 = vcmp.gt.f32.partialorder %v2528, 0.0
        %vm2545 = vcmp.gt.f32.partialorder %v2529, 0.0
        %vm2546 = vcmp.gt.f32.partialorder %v2530, 0.0
        %vm2547 = vcmp.gt.f32.partialorder %v2531, 0.0
        %vm2548 = vcmp.gt.f32.partialorder %v2532, 0.0
        %vm2549 = vcmp.gt.f32.partialorder %v2533, 0.0
        %vm2550 = vcmp.gt.f32.partialorder %v2534, 0.0
        %vm2551 = vcmp.gt.f32.partialorder %v2535, 0.0
        %vm2552 = vcmp.gt.f32.partialorder %v2536, 0.0
        %v2553 = vmul.f32 %v2521, 0.01
        %v2554 = vmul.f32 %v2522, 0.01
        %v2555 = vmul.f32 %v2523, 0.01
        %v2556 = vmul.f32 %v2524, 0.01
        %v2557 = vmul.f32 %v2525, 0.01
        %v2558 = vmul.f32 %v2526, 0.01
        %v2559 = vmul.f32 %v2527, 0.01
        %v2560 = vmul.f32 %v2528, 0.01
        %v2561 = vmul.f32 %v2529, 0.01
        %v2562 = vmul.f32 %v2530, 0.01
        %v2563 = vmul.f32 %v2531, 0.01
        %v2564 = vmul.f32 %v2532, 0.01
        %v2565 = vmul.f32 %v2533, 0.01
        %v2566 = vmul.f32 %v2534, 0.01
        %v2567 = vmul.f32 %v2535, 0.01
        %v2568 = vmul.f32 %v2536, 0.01
        %v2569 = vsel %vm2537, %v2521, %v2553
        %v2570 = vsel %vm2538, %v2522, %v2554
        %v2571 = vsel %vm2539, %v2523, %v2555
        %v2572 = vsel %vm2540, %v2524, %v2556
        %v2573 = vsel %vm2541, %v2525, %v2557
        %v2574 = vsel %vm2542, %v2526, %v2558
        %v2575 = vsel %vm2543, %v2527, %v2559
        %v2576 = vsel %vm2544, %v2528, %v2560
        %v2577 = vsel %vm2545, %v2529, %v2561
        %v2578 = vsel %vm2546, %v2530, %v2562
        %v2579 = vsel %vm2547, %v2531, %v2563
        %v2580 = vsel %vm2548, %v2532, %v2564
        %v2581 = vsel %vm2549, %v2533, %v2565
        %v2582 = vsel %vm2550, %v2534, %v2566
        %v2583 = vsel %vm2551, %v2535, %v2567
        %v2584 = vsel %vm2552, %v2536, %v2568
        %v2585 = vld [vmem:[%s436] sm:$0xff]
        %v2586 = vld [vmem:[%s436 + $0x8] sm:$0xff]
        %v2587 = vld [vmem:[%s436 + $0x10] sm:$0xff]
        %v2588 = vld [vmem:[%s436 + $0x18] sm:$0xff]
        %v2589 = vld [vmem:[%s436 + $0x20] sm:$0xff]
        %v2590 = vld [vmem:[%s436 + $0x28] sm:$0xff]
        %v2591 = vld [vmem:[%s436 + $0x30] sm:$0xff]
        %v2592 = vld [vmem:[%s436 + $0x38] sm:$0xff]
        %v2593 = vld [vmem:[%s436 + $0x40] sm:$0xff]
        %v2594 = vld [vmem:[%s436 + $0x48] sm:$0xff]
        %v2595 = vld [vmem:[%s436 + $0x50] sm:$0xff]
        %v2596 = vld [vmem:[%s436 + $0x58] sm:$0xff]
        %v2597 = vld [vmem:[%s436 + $0x60] sm:$0xff]
        %v2598 = vld [vmem:[%s436 + $0x68] sm:$0xff]
        %v2599 = vld [vmem:[%s436 + $0x70] sm:$0xff]
        %v2600 = vld [vmem:[%s436 + $0x78] sm:$0xff]
        %v2601 = vadd.f32 %v2569, %v2585
        %v2602 = vadd.f32 %v2570, %v2586
        %v2603 = vadd.f32 %v2571, %v2587
        %v2604 = vadd.f32 %v2572, %v2588
        %v2605 = vadd.f32 %v2573, %v2589
        %v2606 = vadd.f32 %v2574, %v2590
        %v2607 = vadd.f32 %v2575, %v2591
        %v2608 = vadd.f32 %v2576, %v2592
        %v2609 = vadd.f32 %v2577, %v2593
        %v2610 = vadd.f32 %v2578, %v2594
        %v2611 = vadd.f32 %v2579, %v2595
        %v2612 = vadd.f32 %v2580, %v2596
        %v2613 = vadd.f32 %v2581, %v2597
        %v2614 = vadd.f32 %v2582, %v2598
        %v2615 = vadd.f32 %v2583, %v2599
        %v2616 = vadd.f32 %v2584, %v2600
        %2617 = vst [vmem:[%s506] sm:$0xff] %v2601
        %2618 = vst [vmem:[%s506 + $0x8] sm:$0xff] %v2602
        %2619 = vst [vmem:[%s506 + $0x10] sm:$0xff] %v2603
        %2620 = vst [vmem:[%s506 + $0x18] sm:$0xff] %v2604
        %2621 = vst [vmem:[%s506 + $0x20] sm:$0xff] %v2605
        %2622 = vst [vmem:[%s506 + $0x28] sm:$0xff] %v2606
        %2623 = vst [vmem:[%s506 + $0x30] sm:$0xff] %v2607
        %2624 = vst [vmem:[%s506 + $0x38] sm:$0xff] %v2608
        %2625 = vst [vmem:[%s506 + $0x40] sm:$0xff] %v2609
        %2626 = vst [vmem:[%s506 + $0x48] sm:$0xff] %v2610
        %2627 = vst [vmem:[%s506 + $0x50] sm:$0xff] %v2611
        %2628 = vst [vmem:[%s506 + $0x58] sm:$0xff] %v2612
        %2629 = vst [vmem:[%s506 + $0x60] sm:$0xff] %v2613
        %2630 = vst [vmem:[%s506 + $0x68] sm:$0xff] %v2614
        %2631 = vst [vmem:[%s506 + $0x70] sm:$0xff] %v2615
        %2632 = vst [vmem:[%s506 + $0x78] sm:$0xff] %v2616
        %s2633 = sand.u32 %s278, 1
        %s2634 = scalar_lea.sflag [#allocation5], %s2633
        %s2635 = sand.u32 %s278, 1
        %s2636 = smul.addr %s2635, 128
        %s2637 = scalar_lea.vmem [#allocation12], %s2636
        // Predicated region
        $region77: #{tpu_custom_call.1} parent=55 // pred_check
          %p2638 = pneg %p288
        $region78: #{tpu_custom_call.1} parent=55 // pred_check_branch
          %2640 = sbr.rel (%p2638) target = $region80
        $region79: #{tpu_custom_call.1} parent=55 // pred_region
          %s2641 = smul.u32 16, %s35
          %s2643 = ssub.s32 2048, 2048
          %2644 = vsyncadd %s2634, %s2643
          %s2645 = smul.addr %s34, 32
          %s2646 = sadd.s32 %s2641, %s2645
          %s2647 = smul.addr %s2646, 128
          %s2648 = scalar_lea.hbm %s9, %s2647
          %s2649 = sshll.u32 %s2637, 4
          %s2650 = int_to_ptr.vmem [resolvable:$true] %s2649
          %2655 = dma.vmem_to_hbm [thread:$0]  %s2650, 2048, %s2648, %s2634, 128, 128, 8
        $region80: #{tpu_custom_call.1} parent=55 // pred_fallthru
          _
      $region56: #{tpu_custom_call.1} parent=5 // pred_fallthru
        _
      %p2656 = scmp.le.s32.totalorder 2, %s25
      // Predicated region
      $region81: #{tpu_custom_call.1} parent=5 // pred_check
        %p2657 = pneg %p2656
      $region82: #{tpu_custom_call.1} parent=5 // pred_check_branch
        %2659 = sbr.rel (%p2657) target = $region84
      $region83: #{tpu_custom_call.1} parent=5 // pred_region
        %s2660 = ssub.s32 %s25, 2
        // Predicated region
        $region85: #{tpu_custom_call.1} parent=83 // pred_check
          %p2661 = pneg %p294
        $region86: #{tpu_custom_call.1} parent=83 // pred_check_branch
          %2663 = sbr.rel (%p2661) target = $region88
        $region87: #{tpu_custom_call.1} parent=83 // pred_region
          %s2664 = sand.u32 %s279, 1
          %s2665 = scalar_lea.sflag [#allocation5], %s2664
          %s2666 = sand.u32 %s279, 1
          %s2667 = smul.addr %s2666, 128
          %s2668 = scalar_lea.vmem [#allocation12], %s2667
          %2669 = dma.done %s2665, 2048
        $region88: #{tpu_custom_call.1} parent=83 // pred_fallthru
          _
      $region84: #{tpu_custom_call.1} parent=5 // pred_fallthru
        _
    $region6: #{tpu_custom_call.1} parent=1 // loop_footer
      %s29 = sadd.s32 1, %s25
    $region7: #{tpu_custom_call.1} parent=1 // loop_footer_branch
      %24 = sbr.rel target = $region3
    $region8: #{tpu_custom_call.1} parent=1 // loop_exit
      _
    %2670 = vsyncpa [#allocation4], 1
    %s2671 = scalar_lea.sflag [#allocation4], 1
    %2672 = vsyncpa %s2671, 1
    %2673 = vsyncpa [#allocation7], 1
    %s2674 = scalar_lea.sflag [#allocation7], 1
    %2675 = vsyncpa %s2674, 1
    %2676 = vsyncpa [#allocation10], 1
    %2677 = vsyncpa [#allocation5], 1
    %s2678 = scalar_lea.sflag [#allocation5], 1
    %2679 = vsyncpa %s2678, 1

</llo_original>
